<compile_context>
chip_gen: v7x
topology: tpu7x:2x2x1
jax: 0.10.0
libtpu: 0.0.40
codegen_flags: <defaults>
</compile_context>

<pallas_src>
import functools

import jax
import jax.numpy as jnp
import numpy as np
from jax.experimental import pallas as pl
from jax.experimental.pallas import tpu as pltpu


def _round_up(v, m):
    return (v + m - 1) // m * m


def _supports_pipeline_mode():
    # Explicit capability check (construction only) instead of a blanket try/except
    # around the whole pallas_call, so genuine trace/compile errors are not swallowed.
    try:
        pl.BlockSpec((8, 128), lambda i: (i, 0), pipeline_mode=pl.Buffered(2))
        return True
    except Exception:
        return False


_HAS_PIPELINE_MODE = _supports_pipeline_mode()


def _vmem_capacity_bytes():
    try:
        return int(pltpu.get_tpu_info().vmem_capacity_bytes)
    except Exception:
        return 64 << 20  # conservative: v7x per-TensorCore VMEM


def _choose_tm(M, tm_max):
    """Row-tile size: a 128-multiple that divides M exactly, preferring an even
    number of grid steps (>= 2) so both v7x TensorCores get balanced work."""
    if M <= 256:
        return M  # single full-height tile, no row padding (block == full dim is legal)
    hi = min(tm_max, M)
    cands = list(range(128, hi + 1, 128))
    divisors = [t for t in cands if M % t == 0]
    even = [t for t in divisors if (M // t) % 2 == 0]
    if even:
        return max(even)          # e.g. M=768 -> 384 (2 balanced steps, no padding)
    if divisors:
        return max(divisors)
    return max(cands)             # no aligned divisor: pad rows to the largest tile


def _divisor_tiles(Hp):
    """Output-column tile candidates (multiples of 128 dividing Hp), descending."""
    units = Hp // 128
    return sorted({d * 128 for d in range(1, units + 1) if units % d == 0}, reverse=True)


def _qmlp_kernel(x_ref, w1_ref, b1_ref, w2_ref, b2_ref, o_ref, h_ref):
    # x_ref : (tm, Ep) input dtype     w1_ref: (Ep, Hp) bf16    b1_ref: (1, Hp) f32
    # w2_ref: (Hp, tn) bf16            b2_ref: (1, tn) f32      o_ref : (tm, tn)
    # h_ref : (tm, Hp) bf16 VMEM scratch, valid for every N tile of this row tile.
    # Grid = (row tiles, output-column tiles); axis 1 is innermost, so h only needs
    # to be (re)computed when n == 0.
    @pl.when(pl.program_id(1) == 0)
    def _():
        x = x_ref[...].astype(w1_ref.dtype)                       # in-kernel cast -> bf16
        acc1 = jnp.dot(x, w1_ref[...], preferred_element_type=jnp.float32)
        h_ref[...] = jax.nn.sigmoid(acc1 + b1_ref[...]).astype(h_ref.dtype)

    acc2 = jnp.dot(h_ref[...], w2_ref[...], preferred_element_type=jnp.float32)
    o_ref[...] = (acc2 + b2_ref[...]).astype(o_ref.dtype)


@functools.partial(jax.jit, static_argnames=("tm_max", "compute_dtype", "out_dtype"))
def _qmlp_forward_impl(x, w1, b1, w2, b2, *, tm_max, compute_dtype, out_dtype):
    orig_shape = x.shape
    E = x.shape[-1]
    H = w1.shape[-1]
    assert w1.shape == (E, H), "w1 must be pre-transposed to (in, out)"
    assert w2.shape == (H, H), "w2 must be pre-transposed to (in, out)"

    x2 = x.reshape(-1, E)
    M = x2.shape[0]

    cdt = np.dtype(compute_dtype)
    xdt = np.dtype(x.dtype)
    odt = np.dtype(out_dtype)

    # ---- lane-dense feature dims (no-ops when already multiples of 128) ------------
    Ep = _round_up(E, 128)
    Hp = _round_up(H, 128)

    # ---- row tiling: prefer an exact divisor of M (no padded rows) -----------------
    tm = _choose_tm(M, tm_max)
    Mp = _round_up(M, tm)
    num_m = Mp // tm

    # ---- pad only when actually needed (each pad is a full HBM pass) ---------------
    def _pad2(a, rows, cols):
        return jnp.pad(a, ((0, rows), (0, cols))) if (rows or cols) else a

    x2p = _pad2(x2, Mp - M, Ep - E)                       # keep input dtype; kernel casts
    w1p = _pad2(w1, Ep - E, Hp - H).astype(compute_dtype)
    w2p = _pad2(w2, Hp - H, Hp - H).astype(compute_dtype)
    b1p = _pad2(b1.astype(jnp.float32).reshape(1, H), 0, Hp - H)
    b2p = _pad2(b2.astype(jnp.float32).reshape(1, H), 0, Hp - H)
    # Padding is exact: padded hidden columns give sigmoid(0)=0.5 but multiply zero W2
    # rows; padded rows/columns of the output are sliced off below (only if padded).

    # ---- buffering & output-column tiling against the VMEM budget ------------------
    cap = _vmem_capacity_bytes()
    budget = int(0.85 * cap)                              # v7x: ~54 MiB; v5e/v6e: ~109 MiB

    x_bufs = 3 if (_HAS_PIPELINE_MODE and num_m >= 3) else 2   # deepen x pipeline
    w_bufs = 1 if _HAS_PIPELINE_MODE else 2                    # constant-index residents

    est = 0
    tn = Hp
    w2_bufs = 2
    for cand in _divisor_tiles(Hp):
        tn = cand
        w2_bufs = w_bufs if tn == Hp else 2               # W2 block changes with n if tiled
        est = (x_bufs * tm * Ep * xdt.itemsize            # streamed x row tiles
               + 2 * tm * tn * odt.itemsize               # double-buffered output tile
               + w_bufs * (Ep * Hp * cdt.itemsize + Hp * 4)     # W1 + b1 (resident)
               + w2_bufs * (Hp * tn * cdt.itemsize + tn * 4)    # W2/b2 tile
               + tm * Hp * cdt.itemsize)                  # bf16 h scratch
        if est <= budget:
            break
    num_n = Hp // tn
    vmem_limit = max(16 << 20, min(int(est) + (8 << 20), budget))

    def _mode(bufs):
        if _HAS_PIPELINE_MODE and bufs != 2:
            return dict(pipeline_mode=pl.Buffered(bufs))
        return {}

    in_specs = [
        pl.BlockSpec((tm, Ep), lambda i, n: (i, 0), **_mode(x_bufs)),   # x row tile
        pl.BlockSpec((Ep, Hp), lambda i, n: (0, 0), **_mode(w_bufs)),   # W1 (resident)
        pl.BlockSpec((1, Hp), lambda i, n: (0, 0), **_mode(w_bufs)),    # b1
        pl.BlockSpec((Hp, tn), lambda i, n: (0, n), **_mode(w2_bufs)),  # W2 (N-tiled)
        pl.BlockSpec((1, tn), lambda i, n: (0, n), **_mode(w2_bufs)),   # b2
    ]
    out_specs = pl.BlockSpec((tm, tn), lambda i, n: (i, n))

    cost = pl.CostEstimate(
        flops=2 * Mp * (Ep * Hp + Hp * Hp),
        transcendentals=Mp * Hp,                          # sigmoid -> one exp/elem
        bytes_accessed=(Mp * Ep * xdt.itemsize
                        + (Ep * Hp + Hp * Hp) * cdt.itemsize
                        + 2 * Hp * 4
                        + Mp * Hp * odt.itemsize))

    out = pl.pallas_call(
        _qmlp_kernel,
        out_shape=jax.ShapeDtypeStruct((Mp, Hp), out_dtype),
        grid_spec=pltpu.PrefetchScalarGridSpec(
            num_scalar_prefetch=0,
            grid=(num_m, num_n),
            in_specs=in_specs,
            out_specs=out_specs,
            scratch_shapes=[pltpu.VMEM((tm, Hp), compute_dtype)],   # bf16 h scratch
        ),
        compiler_params=pltpu.CompilerParams(
            # Row axis sharded across v7x's two TensorCores; the N axis carries the
            # h-scratch dependency so it stays "arbitrary".
            dimension_semantics=("parallel", "arbitrary"),
            vmem_limit_bytes=int(vmem_limit)),
        cost_estimate=cost,
    )(x2p, w1p, b1p, w2p, b2p)

    if Mp != M or Hp != H:
        out = out[:M, :H]
    return out.reshape(*orig_shape[:-1], H)


def qmlp_forward(x, w1, b1, w2, b2, *, tm_max=512,
                 compute_dtype=jnp.bfloat16, out_dtype=None):
    """x: (..., E) -> (..., H).  Fused Linear -> Sigmoid -> Linear on the MXU.

    out_dtype defaults to x.dtype (PyTorch semantics); pass jnp.bfloat16 if the
    consumer accepts it to halve the output HBM writeback.
    """
    if out_dtype is None:
        out_dtype = x.dtype
    return _qmlp_forward_impl(x, w1, b1, w2, b2, tm_max=tm_max,
                              compute_dtype=jnp.dtype(compute_dtype),
                              out_dtype=jnp.dtype(out_dtype))


def init_qmlp_params(key, emb_hidden_size, q_hidden_size, dtype=jnp.float32):
    """Deterministic synthetic parameters (weights already transposed to [in, out])."""
    k1, k2, k3, k4 = jax.random.split(key, 4)
    s1 = 1.0 / jnp.sqrt(emb_hidden_size)
    s2 = 1.0 / jnp.sqrt(q_hidden_size)
    w1 = jax.random.uniform(k1, (emb_hidden_size, q_hidden_size), dtype, -s1, s1)
    b1 = jax.random.uniform(k2, (q_hidden_size,), dtype, -s1, s1)
    w2 = jax.random.uniform(k3, (q_hidden_size, q_hidden_size), dtype, -s2, s2)
    b2 = jax.random.uniform(k4, (q_hidden_size,), dtype, -s2, s2)
    return w1, b1, w2, b2


if __name__ == "__main__":
    # Lane-dense feature dims and M=768 rows: exercises the divisor-based row tiling
    # (tm=384, 2 balanced grid steps, zero padding / zero wrapper copies).
    batch, seq = 2, 384
    emb_hidden_size, q_hidden_size = 256, 128

    key = jax.random.PRNGKey(0)
    kx, kp = jax.random.split(key)
    x = jax.random.normal(kx, (batch, seq, emb_hidden_size), jnp.float32)
    w1, b1, w2, b2 = init_qmlp_params(kp, emb_hidden_size, q_hidden_size)

    y = qmlp_forward(x, w1, b1, w2, b2)          # bf16 MXU inputs / f32 accumulate
    jax.block_until_ready(y)
    assert y.shape == (batch, seq, q_hidden_size)
    assert y.dtype == x.dtype

    # Pure-JAX reference using the same bf16-input / f32-accumulate recipe.
    f32 = jnp.float32
    xc = x.astype(jnp.bfloat16).astype(f32)
    w1c = w1.astype(jnp.bfloat16).astype(f32)
    w2c = w2.astype(jnp.bfloat16).astype(f32)
    h_ref = jax.nn.sigmoid(xc @ w1c + b1)
    y_ref = h_ref.astype(jnp.bfloat16).astype(f32) @ w2c + b2
    err = float(jnp.max(jnp.abs(y - y_ref)))
    assert jnp.allclose(y, y_ref, atol=5e-3, rtol=5e-3), f"max abs err {err}"

    print("KERNEL_OK")
</pallas_src>

<mosaic_0001>
module attributes {stable_mosaic.version = 11 : i64} {
  func.func @_qmlp_kernel(%arg0: i32, %arg1: i32, %arg2: memref<384x256xf32, #tpu.memory_space<vmem>>, %arg3: memref<256x128xbf16, #tpu.memory_space<vmem>>, %arg4: memref<1x128xf32, #tpu.memory_space<vmem>>, %arg5: memref<128x128xbf16, #tpu.memory_space<vmem>>, %arg6: memref<1x128xf32, #tpu.memory_space<vmem>>, %arg7: memref<384x128xf32, #tpu.memory_space<vmem>>, %arg8: memref<384x128xbf16, #tpu.memory_space<vmem>>) attributes {dimension_semantics = [#tpu.dimension_semantics<parallel>, #tpu.dimension_semantics<arbitrary>], iteration_bounds = array<i64: 2, 1>, scalar_prefetch = 0 : i64, scratch_operands = 1 : i64, tpu.core_type = #tpu.core_type<tc>, window_params = [{transform_indices = @transform_0, window_bounds = array<i64: 384, 256>}, {pipeline_mode = #tpu.pipeline_mode<synchronous>, transform_indices = @transform_1, window_bounds = array<i64: 256, 128>}, {pipeline_mode = #tpu.pipeline_mode<synchronous>, transform_indices = @transform_2, window_bounds = array<i64: 1, 128>}, {pipeline_mode = #tpu.pipeline_mode<synchronous>, transform_indices = @transform_3, window_bounds = array<i64: 128, 128>}, {pipeline_mode = #tpu.pipeline_mode<synchronous>, transform_indices = @transform_4, window_bounds = array<i64: 1, 128>}, {transform_indices = @transform_5, window_bounds = array<i64: 384, 128>}]} {
    %c0_i32 = arith.constant 0 : i32
    %0 = arith.cmpi eq, %arg1, %c0_i32 : i32
    %1 = arith.extui %0 : i1 to i32
    %c0_i32_0 = arith.constant 0 : i32
    %2 = arith.cmpi ne, %1, %c0_i32_0 : i32
    scf.if %2 {
      %c0_8 = arith.constant 0 : index
      %c0_9 = arith.constant 0 : index
      %10 = vector.load %arg2[%c0_8, %c0_9] : memref<384x256xf32, #tpu.memory_space<vmem>>, vector<384x256xf32>
      %11 = arith.truncf %10 : vector<384x256xf32> to vector<384x256xbf16>
      %c0_10 = arith.constant 0 : index
      %c0_11 = arith.constant 0 : index
      %12 = vector.load %arg3[%c0_10, %c0_11] : memref<256x128xbf16, #tpu.memory_space<vmem>>, vector<256x128xbf16>
      %cst_12 = arith.constant dense<0.000000e+00> : vector<384x128xf32>
      %13 = tpu.matmul %11, %12, %cst_12 {dimension_numbers = #tpu.dot_dimension_numbers<[1], [0], [0], [1], [0, 0, 1, 1], [], []>} : vector<384x256xbf16>, vector<256x128xbf16>, vector<384x128xf32> -> vector<384x128xf32>
      %c0_13 = arith.constant 0 : index
      %c0_14 = arith.constant 0 : index
      %14 = vector.load %arg4[%c0_13, %c0_14] : memref<1x128xf32, #tpu.memory_space<vmem>>, vector<1x128xf32>
      %15 = vector.broadcast %14 : vector<1x128xf32> to vector<384x128xf32>
      %16 = arith.addf %13, %15 : vector<384x128xf32>
      %17 = arith.negf %16 : vector<384x128xf32>
      %18 = math.exp %17 : vector<384x128xf32>
      %cst_15 = arith.constant 1.000000e+00 : f32
      %19 = vector.broadcast %cst_15 : f32 to vector<384x128xf32>
      %20 = arith.addf %19, %18 : vector<384x128xf32>
      %21 = arith.divf %19, %20 : vector<384x128xf32>
      %22 = arith.truncf %21 : vector<384x128xf32> to vector<384x128xbf16>
      %c0_16 = arith.constant 0 : index
      %c0_17 = arith.constant 0 : index
      %23 = vector.load %arg8[%c0_16, %c0_17] : memref<384x128xbf16, #tpu.memory_space<vmem>>, vector<384x128xbf16>
      tpu.vector_store %arg8[%c0_16, %c0_17], %22 {strides = array<i32>} : memref<384x128xbf16, #tpu.memory_space<vmem>>, vector<384x128xbf16>,
    } else {
    }
    %c0 = arith.constant 0 : index
    %c0_1 = arith.constant 0 : index
    %3 = vector.load %arg8[%c0, %c0_1] : memref<384x128xbf16, #tpu.memory_space<vmem>>, vector<384x128xbf16>
    %c0_2 = arith.constant 0 : index
    %c0_3 = arith.constant 0 : index
    %4 = vector.load %arg5[%c0_2, %c0_3] : memref<128x128xbf16, #tpu.memory_space<vmem>>, vector<128x128xbf16>
    %cst = arith.constant dense<0.000000e+00> : vector<384x128xf32>
    %5 = tpu.matmul %3, %4, %cst {dimension_numbers = #tpu.dot_dimension_numbers<[1], [0], [0], [1], [0, 0, 1, 1], [], []>} : vector<384x128xbf16>, vector<128x128xbf16>, vector<384x128xf32> -> vector<384x128xf32>
    %c0_4 = arith.constant 0 : index
    %c0_5 = arith.constant 0 : index
    %6 = vector.load %arg6[%c0_4, %c0_5] : memref<1x128xf32, #tpu.memory_space<vmem>>, vector<1x128xf32>
    %7 = vector.broadcast %6 : vector<1x128xf32> to vector<384x128xf32>
    %8 = arith.addf %5, %7 : vector<384x128xf32>
    %c0_6 = arith.constant 0 : index
    %c0_7 = arith.constant 0 : index
    %9 = vector.load %arg7[%c0_6, %c0_7] : memref<384x128xf32, #tpu.memory_space<vmem>>, vector<384x128xf32>
    tpu.vector_store %arg7[%c0_6, %c0_7], %8 {strides = array<i32>} : memref<384x128xf32, #tpu.memory_space<vmem>>, vector<384x128xf32>,
    return
  }
  func.func @transform_0(%arg0: i32, %arg1: i32) -> (i32, i32) {
    %c0_i32 = arith.constant 0 : i32
    %c0_i32_0 = arith.constant 0 : i32
    return %arg0, %c0_i32 : i32, i32
  }
  func.func @transform_1(%arg0: i32, %arg1: i32) -> (i32, i32) {
    %c0_i32 = arith.constant 0 : i32
    %c0_i32_0 = arith.constant 0 : i32
    %c0_i32_1 = arith.constant 0 : i32
    return %c0_i32, %c0_i32_0 : i32, i32
  }
  func.func @transform_2(%arg0: i32, %arg1: i32) -> (i32, i32) {
    %c0_i32 = arith.constant 0 : i32
    %c0_i32_0 = arith.constant 0 : i32
    %c0_i32_1 = arith.constant 0 : i32
    return %c0_i32, %c0_i32_0 : i32, i32
  }
  func.func @transform_3(%arg0: i32, %arg1: i32) -> (i32, i32) {
    %c0_i32 = arith.constant 0 : i32
    %c0_i32_0 = arith.constant 0 : i32
    return %c0_i32, %arg1 : i32, i32
  }
  func.func @transform_4(%arg0: i32, %arg1: i32) -> (i32, i32) {
    %c0_i32 = arith.constant 0 : i32
    %c0_i32_0 = arith.constant 0 : i32
    return %c0_i32, %arg1 : i32, i32
  }
  func.func @transform_5(%arg0: i32, %arg1: i32) -> (i32, i32) {
    %c0_i32 = arith.constant 0 : i32
    return %arg0, %arg1 : i32, i32
  }
}

</mosaic_0001>

<llo_original>
// kernel: _qmlp_forward_impl.1
$region0: #{_qmlp_forward_impl.1}
  #allocation0 [shape = 'u32[]', space=smem, size = 0x4, offset = 0x4, fixed_abs, tag = 'smem constant byte address 0x4 - core index']
  #allocation1 [shape = 'u32[144,128]{1,0:T(1,128)}', space=vmem, size = 0x12000, scoped, tag = 'internal scratch']
  #allocation2 [shape = 'bf16[384,128]{1,0:T(16,128)(2,1)}', space=vmem, size = 0x18000, scoped, tag = 'scratch operand']
  %s0 = inlined_call_operand.hbm [shape: f32[768,256], index: 0, kind: input, shape index: {}]
  %s1 = inlined_call_operand.vmem [shape: bf16[256,128], index: 1, kind: input, shape index: {}]
  %s2 = inlined_call_operand.vmem [shape: f32[1,128], index: 2, kind: input, shape index: {}]
  %s3 = inlined_call_operand.vmem [shape: bf16[128,128], index: 3, kind: input, shape index: {}]
  %s4 = inlined_call_operand.vmem [shape: f32[1,128], index: 4, kind: input, shape index: {}]
  %s5 = inlined_call_operand.hbm [shape: f32[768,128], index: 5, kind: output, shape index: {}]
  %s6 = sld [smem:[#allocation0]]
  $region61: #{_qmlp_forward_impl.1} parent=0
    _
  %s8 = ssub.s32 1, %s6
  %s9 = scalar_select 0, %s8, %s6
  $region1: #{_qmlp_forward_impl.1} parent=0
    #allocation3 [shape = 'u8[786432]{0}', space=vmem, size = 0xc0000, scoped, tag = 'input window, operand 0']
    #allocation4 [shape = 's32[2]{0}', space=sflag, size = 0x8, scoped, tag = 'scoped memory for _qmlp_forward_impl.1']
    #allocation5 [shape = 's32[2]{0}', space=sflag, size = 0x8, scoped, tag = 'scoped memory for _qmlp_forward_impl.1']
    #allocation6 [shape = 'u8[393216]{0}', space=vmem, size = 0x60000, scoped, tag = 'output window, operand 0']
    %10 = vsyncpa [#allocation4], 0
    %s11 = scalar_lea.sflag [#allocation4], 1
    %12 = vsyncpa %s11, 0
    %13 = vsyncpa [#allocation5], 0
    %s14 = scalar_lea.sflag [#allocation5], 1
    %15 = vsyncpa %s14, 0
    loop: start=0, step=1, limit=4
    $region2: #{_qmlp_forward_impl.1} parent=1 // loop_pre_header
      _
    $region3: #{_qmlp_forward_impl.1} parent=1 // loop_header
      %s17 = sphi 0, %s21
      %p18 = scmp.ge.s32.totalorder %s17, 4
      %s24 = sphi 0, %s36
      %s25 = sphi 0, %s32
      %s26 = sphi 0, %s24
      %s27 = sphi 0, %s25
      %s28 = sphi 0, %s26
      %s29 = sphi 0, %s27
      %s39 = sphi 0, %s41
      %s42 = sphi 0, %s39
      %s43 = sphi 0, %s42
      %s59 = sphi 0, %s43
      %s63 = sphi 0, %s63
      %s65 = sphi 0, %s63
      %s66 = sphi 0, %s65
      %s80 = sphi 0, %s66
      %s84 = sphi 0, %s84
      %s86 = sphi 0, %s84
      %s87 = sphi 0, %s86
      %s101 = sphi 0, %s87
      %s107 = sphi 0, %s109
      %s110 = sphi 0, %s107
      %s111 = sphi 0, %s110
      %s127 = sphi 0, %s111
      %s133 = sphi 0, %s135
      %s136 = sphi 0, %s133
      %s137 = sphi 0, %s136
      %s153 = sphi 0, %s137
      %s161 = sphi 0, %s163
      %s164 = sphi 0, %s161
      %s165 = sphi 0, %s164
      %s181 = sphi 0, %s165
    $region4: #{_qmlp_forward_impl.1} parent=1 // loop_header_branch
      %20 = sbr.rel (%p18) target = $region8
    $region5: #{_qmlp_forward_impl.1} parent=1 // loop_body
      %s22 = ssub.s32 %s17, 1
      %s23 = ssub.s32 %s17, 2
      %s30 = sadd.s32 1, %s25
      %p31 = scmp.ge.s32.totalorder %s30, 1
      %s32 = scalar_select %p31, 0, %s30
      %s33 = sadd.s32 1, %s24
      %s34 = scalar_select %p31, %s33, %s24
      %p35 = scmp.ge.s32.totalorder %s34, 2
      %s36 = scalar_select %p35, 0, %s34
      %s37 = ssub.s32 %s24, %s36
      %p38 = scmp.eq.s32.totalorder %s37, 0
      %s40 = sadd.s32 %s39, 1
      %s41 = scalar_select %p38, %s39, %s40
      %p44 = pneg %p38
      %p45 = scmp.eq.s32.totalorder %s17, 1
      %p46 = por %p44, %p45
      %p47 = scmp.ne.s32.totalorder %s39, %s42
      %p48 = scmp.eq.s32.totalorder %s17, 0
      %p49 = por %p47, %p48
      %p50 = scmp.ne.s32.totalorder %s39, %s42
      %p51 = scmp.eq.s32.totalorder %s22, 1
      %p52 = por %p50, %p51
      %p53 = scmp.ne.s32.totalorder %s42, %s43
      %p54 = scmp.eq.s32.totalorder %s22, 0
      %p55 = por %p53, %p54
      %p56 = scmp.ne.s32.totalorder %s42, %s43
      %p57 = scmp.eq.s32.totalorder %s23, 1
      %p58 = por %p56, %p57
      %p60 = scmp.ne.s32.totalorder %s43, %s59
      %p61 = scmp.eq.s32.totalorder %s23, 0
      %p62 = por %p60, %p61
      %s64 = sadd.s32 %s63, 1
      %p67 = scmp.eq.s32.totalorder %s17, 1
      %p68 = scmp.ne.s32.totalorder %s63, %s65
      %p69 = scmp.eq.s32.totalorder %s17, 0
      %p70 = por %p68, %p69
      %p71 = scmp.ne.s32.totalorder %s63, %s65
      %p72 = scmp.eq.s32.totalorder %s22, 1
      %p73 = por %p71, %p72
      %p74 = scmp.ne.s32.totalorder %s65, %s66
      %p75 = scmp.eq.s32.totalorder %s22, 0
      %p76 = por %p74, %p75
      %p77 = scmp.ne.s32.totalorder %s65, %s66
      %p78 = scmp.eq.s32.totalorder %s23, 1
      %p79 = por %p77, %p78
      %p81 = scmp.ne.s32.totalorder %s66, %s80
      %p82 = scmp.eq.s32.totalorder %s23, 0
      %p83 = por %p81, %p82
      %s85 = sadd.s32 %s84, 1
      %p88 = scmp.eq.s32.totalorder %s17, 1
      %p89 = scmp.ne.s32.totalorder %s84, %s86
      %p90 = scmp.eq.s32.totalorder %s17, 0
      %p91 = por %p89, %p90
      %p92 = scmp.ne.s32.totalorder %s84, %s86
      %p93 = scmp.eq.s32.totalorder %s22, 1
      %p94 = por %p92, %p93
      %p95 = scmp.ne.s32.totalorder %s86, %s87
      %p96 = scmp.eq.s32.totalorder %s22, 0
      %p97 = por %p95, %p96
      %p98 = scmp.ne.s32.totalorder %s86, %s87
      %p99 = scmp.eq.s32.totalorder %s23, 1
      %p100 = por %p98, %p99
      %p102 = scmp.ne.s32.totalorder %s87, %s101
      %p103 = scmp.eq.s32.totalorder %s23, 0
      %p104 = por %p102, %p103
      %s105 = ssub.s32 %s25, %s32
      %p106 = scmp.eq.s32.totalorder %s105, 0
      %s108 = sadd.s32 %s107, 1
      %s109 = scalar_select %p106, %s107, %s108
      %p112 = pneg %p106
      %p113 = scmp.eq.s32.totalorder %s17, 1
      %p114 = por %p112, %p113
      %p115 = scmp.ne.s32.totalorder %s107, %s110
      %p116 = scmp.eq.s32.totalorder %s17, 0
      %p117 = por %p115, %p116
      %p118 = scmp.ne.s32.totalorder %s107, %s110
      %p119 = scmp.eq.s32.totalorder %s22, 1
      %p120 = por %p118, %p119
      %p121 = scmp.ne.s32.totalorder %s110, %s111
      %p122 = scmp.eq.s32.totalorder %s22, 0
      %p123 = por %p121, %p122
      %p124 = scmp.ne.s32.totalorder %s110, %s111
      %p125 = scmp.eq.s32.totalorder %s23, 1
      %p126 = por %p124, %p125
      %p128 = scmp.ne.s32.totalorder %s111, %s127
      %p129 = scmp.eq.s32.totalorder %s23, 0
      %p130 = por %p128, %p129
      %s131 = ssub.s32 %s25, %s32
      %p132 = scmp.eq.s32.totalorder %s131, 0
      %s134 = sadd.s32 %s133, 1
      %s135 = scalar_select %p132, %s133, %s134
      %p138 = pneg %p132
      %p139 = scmp.eq.s32.totalorder %s17, 1
      %p140 = por %p138, %p139
      %p141 = scmp.ne.s32.totalorder %s133, %s136
      %p142 = scmp.eq.s32.totalorder %s17, 0
      %p143 = por %p141, %p142
      %p144 = scmp.ne.s32.totalorder %s133, %s136
      %p145 = scmp.eq.s32.totalorder %s22, 1
      %p146 = por %p144, %p145
      %p147 = scmp.ne.s32.totalorder %s136, %s137
      %p148 = scmp.eq.s32.totalorder %s22, 0
      %p149 = por %p147, %p148
      %p150 = scmp.ne.s32.totalorder %s136, %s137
      %p151 = scmp.eq.s32.totalorder %s23, 1
      %p152 = por %p150, %p151
      %p154 = scmp.ne.s32.totalorder %s137, %s153
      %p155 = scmp.eq.s32.totalorder %s23, 0
      %p156 = por %p154, %p155
      %s157 = ssub.s32 %s24, %s36
      %s158 = ssub.s32 %s25, %s32
      %s159 = sor.u32 %s157, %s158
      %p160 = scmp.eq.s32.totalorder %s159, 0
      %s162 = sadd.s32 %s161, 1
      %s163 = scalar_select %p160, %s161, %s162
      %p166 = pneg %p160
      %p167 = scmp.eq.s32.totalorder %s17, 1
      %p168 = por %p166, %p167
      %p169 = scmp.ne.s32.totalorder %s161, %s164
      %p170 = scmp.eq.s32.totalorder %s17, 0
      %p171 = por %p169, %p170
      %p172 = scmp.ne.s32.totalorder %s161, %s164
      %p173 = scmp.eq.s32.totalorder %s22, 1
      %p174 = por %p172, %p173
      %p175 = scmp.ne.s32.totalorder %s164, %s165
      %p176 = scmp.eq.s32.totalorder %s22, 0
      %p177 = por %p175, %p176
      %p178 = scmp.ne.s32.totalorder %s164, %s165
      %p179 = scmp.eq.s32.totalorder %s23, 1
      %p180 = por %p178, %p179
      %p182 = scmp.ne.s32.totalorder %s165, %s181
      %p183 = scmp.eq.s32.totalorder %s23, 0
      %p184 = por %p182, %p183
      %p185 = scmp.le.s32.totalorder 1, %s17
      %p186 = scmp.lt.s32.totalorder %s17, 3
      %p187 = pnand %p185, %p186
      %p188 = pneg %p187
      // Predicated region
      $region9: #{_qmlp_forward_impl.1} parent=5 // pred_check
        _
      $region10: #{_qmlp_forward_impl.1} parent=5 // pred_check_branch
        %190 = sbr.rel (%p187) target = $region12
      $region11: #{_qmlp_forward_impl.1} parent=5 // pred_region
        %s191 = ssub.s32 %s17, 1
        // Predicated region
        $region13: #{_qmlp_forward_impl.1} parent=11 // pred_check
          %p192 = pneg %p76
        $region14: #{_qmlp_forward_impl.1} parent=11 // pred_check_branch
          %194 = sbr.rel (%p192) target = $region16
        $region15: #{_qmlp_forward_impl.1} parent=11 // pred_region
          _
        $region16: #{_qmlp_forward_impl.1} parent=11 // pred_fallthru
          _
        // Predicated region
        $region17: #{_qmlp_forward_impl.1} parent=11 // pred_check
          %p195 = pneg %p97
        $region18: #{_qmlp_forward_impl.1} parent=11 // pred_check_branch
          %197 = sbr.rel (%p195) target = $region20
        $region19: #{_qmlp_forward_impl.1} parent=11 // pred_region
          _
        $region20: #{_qmlp_forward_impl.1} parent=11 // pred_fallthru
          _
        // Predicated region
        $region21: #{_qmlp_forward_impl.1} parent=11 // pred_check
          %p198 = pneg %p123
        $region22: #{_qmlp_forward_impl.1} parent=11 // pred_check_branch
          %200 = sbr.rel (%p198) target = $region24
        $region23: #{_qmlp_forward_impl.1} parent=11 // pred_region
          %p201 = scmp.lt.s32.totalorder %s27, 0
          %s202 = scalar_select %p201, %s27, 0
          %s203 = smul.addr %s202, 4
          %s204 = scalar_lea.vmem %s3, %s203
        $region24: #{_qmlp_forward_impl.1} parent=11 // pred_fallthru
          _
        // Predicated region
        $region25: #{_qmlp_forward_impl.1} parent=11 // pred_check
          %p205 = pneg %p149
        $region26: #{_qmlp_forward_impl.1} parent=11 // pred_check_branch
          %207 = sbr.rel (%p205) target = $region28
        $region27: #{_qmlp_forward_impl.1} parent=11 // pred_region
          %p208 = scmp.lt.s32.totalorder %s27, 0
          %s209 = scalar_select %p208, %s27, 0
          %s210 = scalar_lea.vmem %s4, %s209
        $region28: #{_qmlp_forward_impl.1} parent=11 // pred_fallthru
          _
      $region12: #{_qmlp_forward_impl.1} parent=5 // pred_fallthru
        _
      %p211 = scmp.lt.s32.totalorder %s17, 2
      // Predicated region
      $region29: #{_qmlp_forward_impl.1} parent=5 // pred_check
        %p212 = pneg %p211
      $region30: #{_qmlp_forward_impl.1} parent=5 // pred_check_branch
        %214 = sbr.rel (%p212) target = $region32
      $region31: #{_qmlp_forward_impl.1} parent=5 // pred_region
        // Predicated region
        $region33: #{_qmlp_forward_impl.1} parent=31 // pred_check
          %p215 = pneg %p49
        $region34: #{_qmlp_forward_impl.1} parent=31 // pred_check_branch
          %217 = sbr.rel (%p215) target = $region36
        $region35: #{_qmlp_forward_impl.1} parent=31 // pred_region
          %s218 = sand.u32 %s39, 1
          %s219 = scalar_lea.sflag [#allocation4], %s218
          %s220 = sand.u32 %s39, 1
          %s221 = smul.addr %s220, 768
          %s222 = scalar_lea.vmem [#allocation3], %s221
          %s223 = smul.u32 48, %s24
          %s225 = ssub.s32 12288, 12288
          %226 = vsyncadd %s219, %s225
          %s227 = smul.addr %s223, 2
          %s228 = smul.addr %s227, 128
          %s229 = scalar_lea.hbm %s0, %s228
          %s230 = sshll.u32 %s222, 4
          %s231 = int_to_ptr.vmem [resolvable:$true] %s230
          %236 = dma.hbm_to_vmem [thread:$0]  %s229, 12288, %s231, %s219, 256, 256, 16
        $region36: #{_qmlp_forward_impl.1} parent=31 // pred_fallthru
          _
      $region32: #{_qmlp_forward_impl.1} parent=5 // pred_fallthru
        _
      %p237 = scmp.le.s32.totalorder 1, %s17
      %p238 = scmp.lt.s32.totalorder %s17, 3
      %p239 = pnand %p237, %p238
      %p240 = pneg %p239
      // Predicated region
      $region37: #{_qmlp_forward_impl.1} parent=5 // pred_check
        _
      $region38: #{_qmlp_forward_impl.1} parent=5 // pred_check_branch
        %242 = sbr.rel (%p239) target = $region40
      $region39: #{_qmlp_forward_impl.1} parent=5 // pred_region
        %s243 = ssub.s32 %s17, 1
        %s244 = sand.u32 %s42, 1
        %s245 = scalar_lea.sflag [#allocation4], %s244
        %s246 = sand.u32 %s42, 1
        %s247 = smul.addr %s246, 768
        %s248 = scalar_lea.vmem [#allocation3], %s247
        // Predicated region
        $region41: #{_qmlp_forward_impl.1} parent=39 // pred_check
          %p249 = pneg %p55
        $region42: #{_qmlp_forward_impl.1} parent=39 // pred_check_branch
          %251 = sbr.rel (%p249) target = $region44
        $region43: #{_qmlp_forward_impl.1} parent=39 // pred_region
          %252 = dma.done %s245, 12288
        $region44: #{_qmlp_forward_impl.1} parent=39 // pred_fallthru
          _
        %s253 = sand.u32 %s42, 1
        %s254 = scalar_lea.sflag [#allocation4], %s253
        %s255 = sand.u32 %s42, 1
        %s256 = smul.addr %s255, 768
        %s257 = scalar_lea.vmem [#allocation3], %s256
        %p258 = pneg %p55
        %p259 = pneg %p52
        %p260 = pneg %p76
        %p261 = pneg %p73
        %p262 = pneg %p97
        %p263 = pneg %p94
        %p264 = scmp.lt.s32.totalorder %s27, 0
        %s265 = scalar_select %p264, %s27, 0
        %s266 = smul.addr %s265, 4
        %s267 = scalar_lea.vmem %s3, %s266
        %p268 = pneg %p123
        %p269 = pneg %p120
        %p270 = scmp.lt.s32.totalorder %s27, 0
        %s271 = scalar_select %p270, %s27, 0
        %s272 = scalar_lea.vmem %s4, %s271
        %p273 = pneg %p149
        %p274 = pneg %p146
        %p275 = pneg %p177
        %p276 = pneg %p174
        %s277 = sand.u32 %s164, 1
        %s278 = scalar_lea.sflag [#allocation5], %s277
        %s279 = sand.u32 %s164, 1
        %s280 = smul.addr %s279, 384
        %s281 = scalar_lea.vmem [#allocation6], %s280
        %s282 = smul.u32 48, %s26
        %p283 = scmp.lt.s32.totalorder %s27, 0
        %s284 = scalar_select %p283, %s27, 0
        %s285 = smul.addr %s284, 4
        %s286 = scalar_lea.vmem %s3, %s285
        %p287 = scmp.lt.s32.totalorder %s27, 0
        %s288 = scalar_select %p287, %s27, 0
        %s289 = scalar_lea.vmem %s4, %s288
        %s290 = smul.u32 48, %s26
        %p292 = scmp.eq.s32.totalorder %s27, 0
        // Predicated region
        $region45: #{_qmlp_forward_impl.1} parent=39 // pred_check
          %p293 = pneg %p292
        $region46: #{_qmlp_forward_impl.1} parent=39 // pred_check_branch
          %295 = sbr.rel (%p293) target = $region48
        $region47: #{_qmlp_forward_impl.1} parent=39 // pred_region
          %v296 = vld [vmem:[%s248] sm:$0xff]
          %v297 = vld [vmem:[%s248 + $0x8] sm:$0xff]
          %v298 = vld [vmem:[%s248 + $0x10] sm:$0xff]
          %v299 = vld [vmem:[%s248 + $0x18] sm:$0xff]
          %v300 = vld [vmem:[%s248 + $0x20] sm:$0xff]
          %v301 = vld [vmem:[%s248 + $0x28] sm:$0xff]
          %v302 = vld [vmem:[%s248 + $0x30] sm:$0xff]
          %v303 = vld [vmem:[%s248 + $0x38] sm:$0xff]
          %v304 = vld [vmem:[%s248 + $0x40] sm:$0xff]
          %v305 = vld [vmem:[%s248 + $0x48] sm:$0xff]
          %v306 = vld [vmem:[%s248 + $0x50] sm:$0xff]
          %v307 = vld [vmem:[%s248 + $0x58] sm:$0xff]
          %v308 = vld [vmem:[%s248 + $0x60] sm:$0xff]
          %v309 = vld [vmem:[%s248 + $0x68] sm:$0xff]
          %v310 = vld [vmem:[%s248 + $0x70] sm:$0xff]
          %v311 = vld [vmem:[%s248 + $0x78] sm:$0xff]
          %v312 = vld [vmem:[%s248 + $0x80] sm:$0xff]
          %v313 = vld [vmem:[%s248 + $0x88] sm:$0xff]
          %v314 = vld [vmem:[%s248 + $0x90] sm:$0xff]
          %v315 = vld [vmem:[%s248 + $0x98] sm:$0xff]
          %v316 = vld [vmem:[%s248 + $0xa0] sm:$0xff]
          %v317 = vld [vmem:[%s248 + $0xa8] sm:$0xff]
          %v318 = vld [vmem:[%s248 + $0xb0] sm:$0xff]
          %v319 = vld [vmem:[%s248 + $0xb8] sm:$0xff]
          %v320 = vld [vmem:[%s248 + $0xc0] sm:$0xff]
          %v321 = vld [vmem:[%s248 + $0xc8] sm:$0xff]
          %v322 = vld [vmem:[%s248 + $0xd0] sm:$0xff]
          %v323 = vld [vmem:[%s248 + $0xd8] sm:$0xff]
          %v324 = vld [vmem:[%s248 + $0xe0] sm:$0xff]
          %v325 = vld [vmem:[%s248 + $0xe8] sm:$0xff]
          %v326 = vld [vmem:[%s248 + $0xf0] sm:$0xff]
          %v327 = vld [vmem:[%s248 + $0xf8] sm:$0xff]
          %v328 = vld [vmem:[%s248 + $0x100] sm:$0xff]
          %v329 = vld [vmem:[%s248 + $0x108] sm:$0xff]
          %v330 = vld [vmem:[%s248 + $0x110] sm:$0xff]
          %v331 = vld [vmem:[%s248 + $0x118] sm:$0xff]
          %v332 = vld [vmem:[%s248 + $0x120] sm:$0xff]
          %v333 = vld [vmem:[%s248 + $0x128] sm:$0xff]
          %v334 = vld [vmem:[%s248 + $0x130] sm:$0xff]
          %v335 = vld [vmem:[%s248 + $0x138] sm:$0xff]
          %v336 = vld [vmem:[%s248 + $0x140] sm:$0xff]
          %v337 = vld [vmem:[%s248 + $0x148] sm:$0xff]
          %v338 = vld [vmem:[%s248 + $0x150] sm:$0xff]
          %v339 = vld [vmem:[%s248 + $0x158] sm:$0xff]
          %v340 = vld [vmem:[%s248 + $0x160] sm:$0xff]
          %v341 = vld [vmem:[%s248 + $0x168] sm:$0xff]
          %v342 = vld [vmem:[%s248 + $0x170] sm:$0xff]
          %v343 = vld [vmem:[%s248 + $0x178] sm:$0xff]
          %v344 = vld [vmem:[%s248 + $0x180] sm:$0xff]
          %v345 = vld [vmem:[%s248 + $0x188] sm:$0xff]
          %v346 = vld [vmem:[%s248 + $0x190] sm:$0xff]
          %v347 = vld [vmem:[%s248 + $0x198] sm:$0xff]
          %v348 = vld [vmem:[%s248 + $0x1a0] sm:$0xff]
          %v349 = vld [vmem:[%s248 + $0x1a8] sm:$0xff]
          %v350 = vld [vmem:[%s248 + $0x1b0] sm:$0xff]
          %v351 = vld [vmem:[%s248 + $0x1b8] sm:$0xff]
          %v352 = vld [vmem:[%s248 + $0x1c0] sm:$0xff]
          %v353 = vld [vmem:[%s248 + $0x1c8] sm:$0xff]
          %v354 = vld [vmem:[%s248 + $0x1d0] sm:$0xff]
          %v355 = vld [vmem:[%s248 + $0x1d8] sm:$0xff]
          %v356 = vld [vmem:[%s248 + $0x1e0] sm:$0xff]
          %v357 = vld [vmem:[%s248 + $0x1e8] sm:$0xff]
          %v358 = vld [vmem:[%s248 + $0x1f0] sm:$0xff]
          %v359 = vld [vmem:[%s248 + $0x1f8] sm:$0xff]
          %v360 = vld [vmem:[%s248 + $0x200] sm:$0xff]
          %v361 = vld [vmem:[%s248 + $0x208] sm:$0xff]
          %v362 = vld [vmem:[%s248 + $0x210] sm:$0xff]
          %v363 = vld [vmem:[%s248 + $0x218] sm:$0xff]
          %v364 = vld [vmem:[%s248 + $0x220] sm:$0xff]
          %v365 = vld [vmem:[%s248 + $0x228] sm:$0xff]
          %v366 = vld [vmem:[%s248 + $0x230] sm:$0xff]
          %v367 = vld [vmem:[%s248 + $0x238] sm:$0xff]
          %v368 = vld [vmem:[%s248 + $0x240] sm:$0xff]
          %v369 = vld [vmem:[%s248 + $0x248] sm:$0xff]
          %v370 = vld [vmem:[%s248 + $0x250] sm:$0xff]
          %v371 = vld [vmem:[%s248 + $0x258] sm:$0xff]
          %v372 = vld [vmem:[%s248 + $0x260] sm:$0xff]
          %v373 = vld [vmem:[%s248 + $0x268] sm:$0xff]
          %v374 = vld [vmem:[%s248 + $0x270] sm:$0xff]
          %v375 = vld [vmem:[%s248 + $0x278] sm:$0xff]
          %v376 = vld [vmem:[%s248 + $0x280] sm:$0xff]
          %v377 = vld [vmem:[%s248 + $0x288] sm:$0xff]
          %v378 = vld [vmem:[%s248 + $0x290] sm:$0xff]
          %v379 = vld [vmem:[%s248 + $0x298] sm:$0xff]
          %v380 = vld [vmem:[%s248 + $0x2a0] sm:$0xff]
          %v381 = vld [vmem:[%s248 + $0x2a8] sm:$0xff]
          %v382 = vld [vmem:[%s248 + $0x2b0] sm:$0xff]
          %v383 = vld [vmem:[%s248 + $0x2b8] sm:$0xff]
          %v384 = vld [vmem:[%s248 + $0x2c0] sm:$0xff]
          %v385 = vld [vmem:[%s248 + $0x2c8] sm:$0xff]
          %v386 = vld [vmem:[%s248 + $0x2d0] sm:$0xff]
          %v387 = vld [vmem:[%s248 + $0x2d8] sm:$0xff]
          %v388 = vld [vmem:[%s248 + $0x2e0] sm:$0xff]
          %v389 = vld [vmem:[%s248 + $0x2e8] sm:$0xff]
          %v390 = vld [vmem:[%s248 + $0x2f0] sm:$0xff]
          %v391 = vld [vmem:[%s248 + $0x2f8] sm:$0xff]
          %v392 = vpack.c.bf16 %v298, %v296
          %v393 = vpack.c.bf16 %v299, %v297
          %v394 = vpack.c.bf16 %v302, %v300
          %v395 = vpack.c.bf16 %v303, %v301
          %v396 = vpack.c.bf16 %v306, %v304
          %v397 = vpack.c.bf16 %v307, %v305
          %v398 = vpack.c.bf16 %v310, %v308
          %v399 = vpack.c.bf16 %v311, %v309
          %v400 = vpack.c.bf16 %v314, %v312
          %v401 = vpack.c.bf16 %v315, %v313
          %v402 = vpack.c.bf16 %v318, %v316
          %v403 = vpack.c.bf16 %v319, %v317
          %v404 = vpack.c.bf16 %v322, %v320
          %v405 = vpack.c.bf16 %v323, %v321
          %v406 = vpack.c.bf16 %v326, %v324
          %v407 = vpack.c.bf16 %v327, %v325
          %v408 = vpack.c.bf16 %v330, %v328
          %v409 = vpack.c.bf16 %v331, %v329
          %v410 = vpack.c.bf16 %v334, %v332
          %v411 = vpack.c.bf16 %v335, %v333
          %v412 = vpack.c.bf16 %v338, %v336
          %v413 = vpack.c.bf16 %v339, %v337
          %v414 = vpack.c.bf16 %v342, %v340
          %v415 = vpack.c.bf16 %v343, %v341
          %v416 = vpack.c.bf16 %v346, %v344
          %v417 = vpack.c.bf16 %v347, %v345
          %v418 = vpack.c.bf16 %v350, %v348
          %v419 = vpack.c.bf16 %v351, %v349
          %v420 = vpack.c.bf16 %v354, %v352
          %v421 = vpack.c.bf16 %v355, %v353
          %v422 = vpack.c.bf16 %v358, %v356
          %v423 = vpack.c.bf16 %v359, %v357
          %v424 = vpack.c.bf16 %v362, %v360
          %v425 = vpack.c.bf16 %v363, %v361
          %v426 = vpack.c.bf16 %v366, %v364
          %v427 = vpack.c.bf16 %v367, %v365
          %v428 = vpack.c.bf16 %v370, %v368
          %v429 = vpack.c.bf16 %v371, %v369
          %v430 = vpack.c.bf16 %v374, %v372
          %v431 = vpack.c.bf16 %v375, %v373
          %v432 = vpack.c.bf16 %v378, %v376
          %v433 = vpack.c.bf16 %v379, %v377
          %v434 = vpack.c.bf16 %v382, %v380
          %v435 = vpack.c.bf16 %v383, %v381
          %v436 = vpack.c.bf16 %v386, %v384
          %v437 = vpack.c.bf16 %v387, %v385
          %v438 = vpack.c.bf16 %v390, %v388
          %v439 = vpack.c.bf16 %v391, %v389
          %v440 = vld [vmem:[%s1] sm:$0xf]
          %v441 = vld [vmem:[%s1 + $0x4] sm:$0xf]
          %v442 = vld [vmem:[%s1 + $0x8] sm:$0xf]
          %v443 = vld [vmem:[%s1 + $0xc] sm:$0xf]
          %v444 = vld [vmem:[%s1 + $0x10] sm:$0xf]
          %v445 = vld [vmem:[%s1 + $0x14] sm:$0xf]
          %v446 = vld [vmem:[%s1 + $0x18] sm:$0xf]
          %v447 = vld [vmem:[%s1 + $0x1c] sm:$0xf]
          %v448 = vld [vmem:[%s1 + $0x20] sm:$0xf]
          %v449 = vld [vmem:[%s1 + $0x24] sm:$0xf]
          %v450 = vld [vmem:[%s1 + $0x28] sm:$0xf]
          %v451 = vld [vmem:[%s1 + $0x2c] sm:$0xf]
          %v452 = vld [vmem:[%s1 + $0x30] sm:$0xf]
          %v453 = vld [vmem:[%s1 + $0x34] sm:$0xf]
          %v454 = vld [vmem:[%s1 + $0x38] sm:$0xf]
          %v455 = vld [vmem:[%s1 + $0x3c] sm:$0xf]
          %v456 = vld [vmem:[%s1 + $0x40] sm:$0xf]
          %v457 = vld [vmem:[%s1 + $0x44] sm:$0xf]
          %v458 = vld [vmem:[%s1 + $0x48] sm:$0xf]
          %v459 = vld [vmem:[%s1 + $0x4c] sm:$0xf]
          %v460 = vld [vmem:[%s1 + $0x50] sm:$0xf]
          %v461 = vld [vmem:[%s1 + $0x54] sm:$0xf]
          %v462 = vld [vmem:[%s1 + $0x58] sm:$0xf]
          %v463 = vld [vmem:[%s1 + $0x5c] sm:$0xf]
          %v464 = vld [vmem:[%s1 + $0x60] sm:$0xf]
          %v465 = vld [vmem:[%s1 + $0x64] sm:$0xf]
          %v466 = vld [vmem:[%s1 + $0x68] sm:$0xf]
          %v467 = vld [vmem:[%s1 + $0x6c] sm:$0xf]
          %v468 = vld [vmem:[%s1 + $0x70] sm:$0xf]
          %v469 = vld [vmem:[%s1 + $0x74] sm:$0xf]
          %v470 = vld [vmem:[%s1 + $0x78] sm:$0xf]
          %v471 = vld [vmem:[%s1 + $0x7c] sm:$0xf]
          %v472 = vld [vmem:[%s2] sm:$0x1]
          %v474 = vlaneseq
          %v475 = vshrl.u32 %v474, 7
          %v476 = vsub.s32 0, %v475
          %v477 = vrot.slane %v472, %v476
          %v511 = vunpack.c.l.b16 %v440
          %v512 = vunpack.c.l.b16 %v441
          %v513 = vunpack.c.l.b16 %v442
          %v514 = vunpack.c.l.b16 %v443
          %v515 = vunpack.c.l.b16 %v444
          %v516 = vunpack.c.l.b16 %v445
          %v517 = vunpack.c.l.b16 %v446
          %v518 = vunpack.c.l.b16 %v447
          %v519 = vunpack.c.l.b16 %v448
          %v520 = vunpack.c.l.b16 %v449
          %v521 = vunpack.c.l.b16 %v450
          %v522 = vunpack.c.l.b16 %v451
          %v523 = vunpack.c.l.b16 %v452
          %v524 = vunpack.c.l.b16 %v453
          %v525 = vunpack.c.l.b16 %v454
          %v526 = vunpack.c.l.b16 %v455
          %v527 = vunpack.c.l.b16 %v456
          %v528 = vunpack.c.l.b16 %v457
          %v529 = vunpack.c.l.b16 %v458
          %v530 = vunpack.c.l.b16 %v459
          %v531 = vunpack.c.l.b16 %v460
          %v532 = vunpack.c.l.b16 %v461
          %v533 = vunpack.c.l.b16 %v462
          %v534 = vunpack.c.l.b16 %v463
          %v535 = vunpack.c.l.b16 %v464
          %v536 = vunpack.c.l.b16 %v465
          %v537 = vunpack.c.l.b16 %v466
          %v538 = vunpack.c.l.b16 %v467
          %v539 = vunpack.c.l.b16 %v468
          %v540 = vunpack.c.l.b16 %v469
          %v541 = vunpack.c.l.b16 %v470
          %v542 = vunpack.c.l.b16 %v471
          %v543 = vpack.c.b16 %v512, %v511
          %v544 = vpack.c.b16 %v514, %v513
          %v545 = vpack.c.b16 %v516, %v515
          %v546 = vpack.c.b16 %v518, %v517
          %v547 = vpack.c.b16 %v520, %v519
          %v548 = vpack.c.b16 %v522, %v521
          %v549 = vpack.c.b16 %v524, %v523
          %v550 = vpack.c.b16 %v526, %v525
          %v551 = vpack.c.b16 %v528, %v527
          %v552 = vpack.c.b16 %v530, %v529
          %v553 = vpack.c.b16 %v532, %v531
          %v554 = vpack.c.b16 %v534, %v533
          %v555 = vpack.c.b16 %v536, %v535
          %v556 = vpack.c.b16 %v538, %v537
          %v557 = vpack.c.b16 %v540, %v539
          %v558 = vpack.c.b16 %v542, %v541
          %575 = vmatprep.subr.bf16.mxu0 0
          %576 = vmatpush1.bf16.msra.mxu0 %v543
          %577 = vmatprep.subr.bf16.mxu0 0
          %578 = vmatpush1.bf16.msra.mxu0 %v544
          %579 = vmatprep.subr.bf16.mxu0 0
          %580 = vmatpush1.bf16.msra.mxu0 %v545
          %581 = vmatprep.subr.bf16.mxu0 0
          %582 = vmatpush1.bf16.msra.mxu0 %v546
          %583 = vmatprep.subr.bf16.mxu0 0
          %584 = vmatpush1.bf16.msra.mxu0 %v547
          %585 = vmatprep.subr.bf16.mxu0 0
          %586 = vmatpush1.bf16.msra.mxu0 %v548
          %587 = vmatprep.subr.bf16.mxu0 0
          %588 = vmatpush1.bf16.msra.mxu0 %v549
          %589 = vmatprep.subr.bf16.mxu0 0
          %590 = vmatpush1.bf16.msra.mxu0 %v550
          %591 = vmatprep.subr.bf16.mxu0 0
          %592 = vmatpush1.bf16.msra.mxu0 %v551
          %593 = vmatprep.subr.bf16.mxu0 0
          %594 = vmatpush1.bf16.msra.mxu0 %v552
          %595 = vmatprep.subr.bf16.mxu0 0
          %596 = vmatpush1.bf16.msra.mxu0 %v553
          %597 = vmatprep.subr.bf16.mxu0 0
          %598 = vmatpush1.bf16.msra.mxu0 %v554
          %599 = vmatprep.subr.bf16.mxu0 0
          %600 = vmatpush1.bf16.msra.mxu0 %v555
          %601 = vmatprep.subr.bf16.mxu0 0
          %602 = vmatpush1.bf16.msra.mxu0 %v556
          %603 = vmatprep.subr.bf16.mxu0 0
          %604 = vmatpush1.bf16.msra.mxu0 %v557
          %605 = vmatprep.subr.bf16.mxu0 0
          %606 = vmatpush1.bf16.msra.mxu0 %v558
          %607 = vmatprep.mubr.bf16.mxu0 %v393
          %608 = vmatmul.mubr.bf16.gmra.mrb[0].mxu0 %v392
          %v609 = vpop.f32.mrb[0].mxu0
          %v610 = vadd.f32 %v477, %v609
          %v611 = vpop.f32.mrb[0].mxu0
          %v612 = vpop.f32.mrb[0].mxu0
          %v613 = vadd.f32 %v477, %v612
          %v614 = vpop.f32.mrb[0].mxu0
          %615 = vmatprep.mubr.bf16.mxu0 %v395
          %616 = vmatmul.mubr.bf16.gmra.mrb[0].mxu0 %v394
          %v617 = vpop.f32.mrb[0].mxu0
          %v618 = vadd.f32 %v477, %v617
          %v619 = vpop.f32.mrb[0].mxu0
          %v620 = vpop.f32.mrb[0].mxu0
          %v621 = vadd.f32 %v477, %v620
          %v622 = vpop.f32.mrb[0].mxu0
          %623 = vmatprep.mubr.bf16.mxu0 %v397
          %624 = vmatmul.mubr.bf16.gmra.mrb[0].mxu0 %v396
          %v625 = vpop.f32.mrb[0].mxu0
          %v626 = vadd.f32 %v477, %v625
          %v627 = vpop.f32.mrb[0].mxu0
          %v628 = vpop.f32.mrb[0].mxu0
          %v629 = vadd.f32 %v477, %v628
          %v630 = vpop.f32.mrb[0].mxu0
          %631 = vmatprep.mubr.bf16.mxu0 %v399
          %632 = vmatmul.mubr.bf16.gmra.mrb[0].mxu0 %v398
          %v633 = vpop.f32.mrb[0].mxu0
          %v634 = vadd.f32 %v477, %v633
          %v635 = vpop.f32.mrb[0].mxu0
          %v636 = vpop.f32.mrb[0].mxu0
          %v637 = vadd.f32 %v477, %v636
          %v638 = vpop.f32.mrb[0].mxu0
          %639 = vmatprep.mubr.bf16.mxu0 %v401
          %640 = vmatmul.mubr.bf16.gmra.mrb[0].mxu0 %v400
          %v641 = vpop.f32.mrb[0].mxu0
          %v642 = vadd.f32 %v477, %v641
          %v643 = vpop.f32.mrb[0].mxu0
          %v644 = vpop.f32.mrb[0].mxu0
          %v645 = vadd.f32 %v477, %v644
          %v646 = vpop.f32.mrb[0].mxu0
          %647 = vmatprep.mubr.bf16.mxu0 %v403
          %648 = vmatmul.mubr.bf16.gmra.mrb[0].mxu0 %v402
          %v649 = vpop.f32.mrb[0].mxu0
          %v650 = vadd.f32 %v477, %v649
          %v651 = vpop.f32.mrb[0].mxu0
          %v652 = vpop.f32.mrb[0].mxu0
          %v653 = vadd.f32 %v477, %v652
          %v654 = vpop.f32.mrb[0].mxu0
          %655 = vmatprep.mubr.bf16.mxu0 %v405
          %656 = vmatmul.mubr.bf16.gmra.mrb[0].mxu0 %v404
          %v657 = vpop.f32.mrb[0].mxu0
          %v658 = vadd.f32 %v477, %v657
          %v659 = vpop.f32.mrb[0].mxu0
          %v660 = vpop.f32.mrb[0].mxu0
          %v661 = vadd.f32 %v477, %v660
          %v662 = vpop.f32.mrb[0].mxu0
          %663 = vmatprep.mubr.bf16.mxu0 %v407
          %664 = vmatmul.mubr.bf16.gmra.mrb[0].mxu0 %v406
          %v665 = vpop.f32.mrb[0].mxu0
          %v666 = vadd.f32 %v477, %v665
          %v667 = vpop.f32.mrb[0].mxu0
          %v668 = vpop.f32.mrb[0].mxu0
          %v669 = vadd.f32 %v477, %v668
          %v670 = vpop.f32.mrb[0].mxu0
          %671 = vmatprep.mubr.bf16.mxu0 %v409
          %672 = vmatmul.mubr.bf16.gmra.mrb[0].mxu0 %v408
          %v673 = vpop.f32.mrb[0].mxu0
          %v674 = vadd.f32 %v477, %v673
          %v675 = vpop.f32.mrb[0].mxu0
          %v676 = vpop.f32.mrb[0].mxu0
          %v677 = vadd.f32 %v477, %v676
          %v678 = vpop.f32.mrb[0].mxu0
          %679 = vmatprep.mubr.bf16.mxu0 %v411
          %680 = vmatmul.mubr.bf16.gmra.mrb[0].mxu0 %v410
          %v681 = vpop.f32.mrb[0].mxu0
          %v682 = vadd.f32 %v477, %v681
          %v683 = vpop.f32.mrb[0].mxu0
          %v684 = vpop.f32.mrb[0].mxu0
          %v685 = vadd.f32 %v477, %v684
          %v686 = vpop.f32.mrb[0].mxu0
          %687 = vmatprep.mubr.bf16.mxu0 %v413
          %688 = vmatmul.mubr.bf16.gmra.mrb[0].mxu0 %v412
          %v689 = vpop.f32.mrb[0].mxu0
          %v690 = vadd.f32 %v477, %v689
          %v691 = vpop.f32.mrb[0].mxu0
          %v692 = vpop.f32.mrb[0].mxu0
          %v693 = vadd.f32 %v477, %v692
          %v694 = vpop.f32.mrb[0].mxu0
          %695 = vmatprep.mubr.bf16.mxu0 %v415
          %696 = vmatmul.mubr.bf16.gmra.mrb[0].mxu0 %v414
          %v697 = vpop.f32.mrb[0].mxu0
          %v698 = vadd.f32 %v477, %v697
          %v699 = vpop.f32.mrb[0].mxu0
          %v700 = vpop.f32.mrb[0].mxu0
          %v701 = vadd.f32 %v477, %v700
          %v702 = vpop.f32.mrb[0].mxu0
          %703 = vmatprep.mubr.bf16.mxu0 %v417
          %704 = vmatmul.mubr.bf16.gmra.mrb[0].mxu0 %v416
          %v705 = vpop.f32.mrb[0].mxu0
          %v706 = vadd.f32 %v477, %v705
          %v707 = vpop.f32.mrb[0].mxu0
          %v708 = vpop.f32.mrb[0].mxu0
          %v709 = vadd.f32 %v477, %v708
          %v710 = vpop.f32.mrb[0].mxu0
          %711 = vmatprep.mubr.bf16.mxu0 %v419
          %712 = vmatmul.mubr.bf16.gmra.mrb[0].mxu0 %v418
          %v713 = vpop.f32.mrb[0].mxu0
          %v714 = vadd.f32 %v477, %v713
          %v715 = vpop.f32.mrb[0].mxu0
          %v716 = vpop.f32.mrb[0].mxu0
          %v717 = vadd.f32 %v477, %v716
          %v718 = vpop.f32.mrb[0].mxu0
          %719 = vmatprep.mubr.bf16.mxu0 %v421
          %720 = vmatmul.mubr.bf16.gmra.mrb[0].mxu0 %v420
          %v721 = vpop.f32.mrb[0].mxu0
          %v722 = vadd.f32 %v477, %v721
          %v723 = vpop.f32.mrb[0].mxu0
          %v724 = vpop.f32.mrb[0].mxu0
          %v725 = vadd.f32 %v477, %v724
          %v726 = vpop.f32.mrb[0].mxu0
          %727 = vmatprep.mubr.bf16.mxu0 %v423
          %728 = vmatmul.mubr.bf16.gmra.mrb[0].mxu0 %v422
          %v729 = vpop.f32.mrb[0].mxu0
          %v730 = vadd.f32 %v477, %v729
          %v731 = vpop.f32.mrb[0].mxu0
          %v732 = vpop.f32.mrb[0].mxu0
          %v733 = vadd.f32 %v477, %v732
          %v734 = vpop.f32.mrb[0].mxu0
          %735 = vmatprep.mubr.bf16.mxu0 %v425
          %736 = vmatmul.mubr.bf16.gmra.mrb[0].mxu0 %v424
          %v737 = vpop.f32.mrb[0].mxu0
          %v738 = vadd.f32 %v477, %v737
          %v739 = vpop.f32.mrb[0].mxu0
          %v740 = vpop.f32.mrb[0].mxu0
          %v741 = vadd.f32 %v477, %v740
          %v742 = vpop.f32.mrb[0].mxu0
          %743 = vmatprep.mubr.bf16.mxu0 %v427
          %744 = vmatmul.mubr.bf16.gmra.mrb[0].mxu0 %v426
          %v745 = vpop.f32.mrb[0].mxu0
          %v746 = vadd.f32 %v477, %v745
          %v747 = vpop.f32.mrb[0].mxu0
          %v748 = vpop.f32.mrb[0].mxu0
          %v749 = vadd.f32 %v477, %v748
          %v750 = vpop.f32.mrb[0].mxu0
          %751 = vmatprep.mubr.bf16.mxu0 %v429
          %752 = vmatmul.mubr.bf16.gmra.mrb[0].mxu0 %v428
          %v753 = vpop.f32.mrb[0].mxu0
          %v754 = vadd.f32 %v477, %v753
          %v755 = vpop.f32.mrb[0].mxu0
          %v756 = vpop.f32.mrb[0].mxu0
          %v757 = vadd.f32 %v477, %v756
          %v758 = vpop.f32.mrb[0].mxu0
          %759 = vmatprep.mubr.bf16.mxu0 %v431
          %760 = vmatmul.mubr.bf16.gmra.mrb[0].mxu0 %v430
          %v761 = vpop.f32.mrb[0].mxu0
          %v762 = vadd.f32 %v477, %v761
          %v763 = vpop.f32.mrb[0].mxu0
          %v764 = vpop.f32.mrb[0].mxu0
          %v765 = vadd.f32 %v477, %v764
          %v766 = vpop.f32.mrb[0].mxu0
          %767 = vmatprep.mubr.bf16.mxu0 %v433
          %768 = vmatmul.mubr.bf16.gmra.mrb[0].mxu0 %v432
          %v769 = vpop.f32.mrb[0].mxu0
          %v770 = vadd.f32 %v477, %v769
          %v771 = vpop.f32.mrb[0].mxu0
          %v772 = vpop.f32.mrb[0].mxu0
          %v773 = vadd.f32 %v477, %v772
          %v774 = vpop.f32.mrb[0].mxu0
          %775 = vmatprep.mubr.bf16.mxu0 %v435
          %776 = vmatmul.mubr.bf16.gmra.mrb[0].mxu0 %v434
          %v777 = vpop.f32.mrb[0].mxu0
          %v778 = vadd.f32 %v477, %v777
          %v779 = vpop.f32.mrb[0].mxu0
          %v780 = vpop.f32.mrb[0].mxu0
          %v781 = vadd.f32 %v477, %v780
          %v782 = vpop.f32.mrb[0].mxu0
          %783 = vmatprep.mubr.bf16.mxu0 %v437
          %784 = vmatmul.mubr.bf16.gmra.mrb[0].mxu0 %v436
          %v785 = vpop.f32.mrb[0].mxu0
          %v786 = vadd.f32 %v477, %v785
          %v787 = vpop.f32.mrb[0].mxu0
          %v788 = vpop.f32.mrb[0].mxu0
          %v789 = vadd.f32 %v477, %v788
          %v790 = vpop.f32.mrb[0].mxu0
          %791 = vmatprep.mubr.bf16.mxu0 %v439
          %792 = vmatmul.mubr.bf16.gmra.mrb[0].mxu0 %v438
          %v793 = vpop.f32.mrb[0].mxu0
          %v794 = vadd.f32 %v477, %v793
          %v795 = vpop.f32.mrb[0].mxu0
          %v796 = vpop.f32.mrb[0].mxu0
          %v797 = vadd.f32 %v477, %v796
          %v798 = vpop.f32.mrb[0].mxu0
          %799 = vdwg.mxu0
          %v800 = vxor.u32 %v610, 2147483648
          %v801 = vxor.u32 %v613, 2147483648
          %v802 = vxor.u32 %v618, 2147483648
          %v803 = vxor.u32 %v621, 2147483648
          %v804 = vxor.u32 %v626, 2147483648
          %v805 = vxor.u32 %v629, 2147483648
          %v806 = vxor.u32 %v634, 2147483648
          %v807 = vxor.u32 %v637, 2147483648
          %v808 = vxor.u32 %v642, 2147483648
          %v809 = vxor.u32 %v645, 2147483648
          %v810 = vxor.u32 %v650, 2147483648
          %v811 = vxor.u32 %v653, 2147483648
          %v812 = vxor.u32 %v658, 2147483648
          %v813 = vxor.u32 %v661, 2147483648
          %v814 = vxor.u32 %v666, 2147483648
          %v815 = vxor.u32 %v669, 2147483648
          %v816 = vxor.u32 %v674, 2147483648
          %v817 = vxor.u32 %v677, 2147483648
          %v818 = vxor.u32 %v682, 2147483648
          %v819 = vxor.u32 %v685, 2147483648
          %v820 = vxor.u32 %v690, 2147483648
          %v821 = vxor.u32 %v693, 2147483648
          %v822 = vxor.u32 %v698, 2147483648
          %v823 = vxor.u32 %v701, 2147483648
          %v824 = vxor.u32 %v706, 2147483648
          %v825 = vxor.u32 %v709, 2147483648
          %v826 = vxor.u32 %v714, 2147483648
          %v827 = vxor.u32 %v717, 2147483648
          %v828 = vxor.u32 %v722, 2147483648
          %v829 = vxor.u32 %v725, 2147483648
          %v830 = vxor.u32 %v730, 2147483648
          %v831 = vxor.u32 %v733, 2147483648
          %v832 = vxor.u32 %v738, 2147483648
          %v833 = vxor.u32 %v741, 2147483648
          %v834 = vxor.u32 %v746, 2147483648
          %v835 = vxor.u32 %v749, 2147483648
          %v836 = vxor.u32 %v754, 2147483648
          %v837 = vxor.u32 %v757, 2147483648
          %v838 = vxor.u32 %v762, 2147483648
          %v839 = vxor.u32 %v765, 2147483648
          %v840 = vxor.u32 %v770, 2147483648
          %v841 = vxor.u32 %v773, 2147483648
          %v842 = vxor.u32 %v778, 2147483648
          %v843 = vxor.u32 %v781, 2147483648
          %v844 = vxor.u32 %v786, 2147483648
          %v845 = vxor.u32 %v789, 2147483648
          %v846 = vxor.u32 %v794, 2147483648
          %v847 = vxor.u32 %v797, 2147483648
          %v848 = vmul.f32 %v800, 1.442695
          %v849 = vpow.pop %v848
          %v850 = vmul.f32 %v801, 1.442695
          %v851 = vpow.pop %v850
          %v852 = vmul.f32 %v802, 1.442695
          %v853 = vpow.pop %v852
          %v854 = vmul.f32 %v803, 1.442695
          %v855 = vpow.pop %v854
          %v856 = vmul.f32 %v804, 1.442695
          %v857 = vpow.pop %v856
          %v858 = vmul.f32 %v805, 1.442695
          %v859 = vpow.pop %v858
          %v860 = vmul.f32 %v806, 1.442695
          %v861 = vpow.pop %v860
          %v862 = vmul.f32 %v807, 1.442695
          %v863 = vpow.pop %v862
          %v864 = vmul.f32 %v808, 1.442695
          %v865 = vpow.pop %v864
          %v866 = vmul.f32 %v809, 1.442695
          %v867 = vpow.pop %v866
          %v868 = vmul.f32 %v810, 1.442695
          %v869 = vpow.pop %v868
          %v870 = vmul.f32 %v811, 1.442695
          %v871 = vpow.pop %v870
          %v872 = vmul.f32 %v812, 1.442695
          %v873 = vpow.pop %v872
          %v874 = vmul.f32 %v813, 1.442695
          %v875 = vpow.pop %v874
          %v876 = vmul.f32 %v814, 1.442695
          %v877 = vpow.pop %v876
          %v878 = vmul.f32 %v815, 1.442695
          %v879 = vpow.pop %v878
          %v880 = vmul.f32 %v816, 1.442695
          %v881 = vpow.pop %v880
          %v882 = vmul.f32 %v817, 1.442695
          %v883 = vpow.pop %v882
          %v884 = vmul.f32 %v818, 1.442695
          %v885 = vpow.pop %v884
          %v886 = vmul.f32 %v819, 1.442695
          %v887 = vpow.pop %v886
          %v888 = vmul.f32 %v820, 1.442695
          %v889 = vpow.pop %v888
          %v890 = vmul.f32 %v821, 1.442695
          %v891 = vpow.pop %v890
          %v892 = vmul.f32 %v822, 1.442695
          %v893 = vpow.pop %v892
          %v894 = vmul.f32 %v823, 1.442695
          %v895 = vpow.pop %v894
          %v896 = vmul.f32 %v824, 1.442695
          %v897 = vpow.pop %v896
          %v898 = vmul.f32 %v825, 1.442695
          %v899 = vpow.pop %v898
          %v900 = vmul.f32 %v826, 1.442695
          %v901 = vpow.pop %v900
          %v902 = vmul.f32 %v827, 1.442695
          %v903 = vpow.pop %v902
          %v904 = vmul.f32 %v828, 1.442695
          %v905 = vpow.pop %v904
          %v906 = vmul.f32 %v829, 1.442695
          %v907 = vpow.pop %v906
          %v908 = vmul.f32 %v830, 1.442695
          %v909 = vpow.pop %v908
          %v910 = vmul.f32 %v831, 1.442695
          %v911 = vpow.pop %v910
          %v912 = vmul.f32 %v832, 1.442695
          %v913 = vpow.pop %v912
          %v914 = vmul.f32 %v833, 1.442695
          %v915 = vpow.pop %v914
          %v916 = vmul.f32 %v834, 1.442695
          %v917 = vpow.pop %v916
          %v918 = vmul.f32 %v835, 1.442695
          %v919 = vpow.pop %v918
          %v920 = vmul.f32 %v836, 1.442695
          %v921 = vpow.pop %v920
          %v922 = vmul.f32 %v837, 1.442695
          %v923 = vpow.pop %v922
          %v924 = vmul.f32 %v838, 1.442695
          %v925 = vpow.pop %v924
          %v926 = vmul.f32 %v839, 1.442695
          %v927 = vpow.pop %v926
          %v928 = vmul.f32 %v840, 1.442695
          %v929 = vpow.pop %v928
          %v930 = vmul.f32 %v841, 1.442695
          %v931 = vpow.pop %v930
          %v932 = vmul.f32 %v842, 1.442695
          %v933 = vpow.pop %v932
          %v934 = vmul.f32 %v843, 1.442695
          %v935 = vpow.pop %v934
          %v936 = vmul.f32 %v844, 1.442695
          %v937 = vpow.pop %v936
          %v938 = vmul.f32 %v845, 1.442695
          %v939 = vpow.pop %v938
          %v940 = vmul.f32 %v846, 1.442695
          %v941 = vpow.pop %v940
          %v942 = vmul.f32 %v847, 1.442695
          %v943 = vpow.pop %v942
          %v944 = vadd.f32 %v849, 1.0
          %v945 = vadd.f32 %v851, 1.0
          %v946 = vadd.f32 %v853, 1.0
          %v947 = vadd.f32 %v855, 1.0
          %v948 = vadd.f32 %v857, 1.0
          %v949 = vadd.f32 %v859, 1.0
          %v950 = vadd.f32 %v861, 1.0
          %v951 = vadd.f32 %v863, 1.0
          %v952 = vadd.f32 %v865, 1.0
          %v953 = vadd.f32 %v867, 1.0
          %v954 = vadd.f32 %v869, 1.0
          %v955 = vadd.f32 %v871, 1.0
          %v956 = vadd.f32 %v873, 1.0
          %v957 = vadd.f32 %v875, 1.0
          %v958 = vadd.f32 %v877, 1.0
          %v959 = vadd.f32 %v879, 1.0
          %v960 = vadd.f32 %v881, 1.0
          %v961 = vadd.f32 %v883, 1.0
          %v962 = vadd.f32 %v885, 1.0
          %v963 = vadd.f32 %v887, 1.0
          %v964 = vadd.f32 %v889, 1.0
          %v965 = vadd.f32 %v891, 1.0
          %v966 = vadd.f32 %v893, 1.0
          %v967 = vadd.f32 %v895, 1.0
          %v968 = vadd.f32 %v897, 1.0
          %v969 = vadd.f32 %v899, 1.0
          %v970 = vadd.f32 %v901, 1.0
          %v971 = vadd.f32 %v903, 1.0
          %v972 = vadd.f32 %v905, 1.0
          %v973 = vadd.f32 %v907, 1.0
          %v974 = vadd.f32 %v909, 1.0
          %v975 = vadd.f32 %v911, 1.0
          %v976 = vadd.f32 %v913, 1.0
          %v977 = vadd.f32 %v915, 1.0
          %v978 = vadd.f32 %v917, 1.0
          %v979 = vadd.f32 %v919, 1.0
          %v980 = vadd.f32 %v921, 1.0
          %v981 = vadd.f32 %v923, 1.0
          %v982 = vadd.f32 %v925, 1.0
          %v983 = vadd.f32 %v927, 1.0
          %v984 = vadd.f32 %v929, 1.0
          %v985 = vadd.f32 %v931, 1.0
          %v986 = vadd.f32 %v933, 1.0
          %v987 = vadd.f32 %v935, 1.0
          %v988 = vadd.f32 %v937, 1.0
          %v989 = vadd.f32 %v939, 1.0
          %v990 = vadd.f32 %v941, 1.0
          %v991 = vadd.f32 %v943, 1.0
          %v992 = vrcp.pop %v944
          %v993 = vmul.f32 1.0, %v992
          %v994 = vrcp.pop %v945
          %v995 = vmul.f32 1.0, %v994
          %v996 = vrcp.pop %v946
          %v997 = vmul.f32 1.0, %v996
          %v998 = vrcp.pop %v947
          %v999 = vmul.f32 1.0, %v998
          %v1000 = vrcp.pop %v948
          %v1001 = vmul.f32 1.0, %v1000
          %v1002 = vrcp.pop %v949
          %v1003 = vmul.f32 1.0, %v1002
          %v1004 = vrcp.pop %v950
          %v1005 = vmul.f32 1.0, %v1004
          %v1006 = vrcp.pop %v951
          %v1007 = vmul.f32 1.0, %v1006
          %v1008 = vrcp.pop %v952
          %v1009 = vmul.f32 1.0, %v1008
          %v1010 = vrcp.pop %v953
          %v1011 = vmul.f32 1.0, %v1010
          %v1012 = vrcp.pop %v954
          %v1013 = vmul.f32 1.0, %v1012
          %v1014 = vrcp.pop %v955
          %v1015 = vmul.f32 1.0, %v1014
          %v1016 = vrcp.pop %v956
          %v1017 = vmul.f32 1.0, %v1016
          %v1018 = vrcp.pop %v957
          %v1019 = vmul.f32 1.0, %v1018
          %v1020 = vrcp.pop %v958
          %v1021 = vmul.f32 1.0, %v1020
          %v1022 = vrcp.pop %v959
          %v1023 = vmul.f32 1.0, %v1022
          %v1024 = vrcp.pop %v960
          %v1025 = vmul.f32 1.0, %v1024
          %v1026 = vrcp.pop %v961
          %v1027 = vmul.f32 1.0, %v1026
          %v1028 = vrcp.pop %v962
          %v1029 = vmul.f32 1.0, %v1028
          %v1030 = vrcp.pop %v963
          %v1031 = vmul.f32 1.0, %v1030
          %v1032 = vrcp.pop %v964
          %v1033 = vmul.f32 1.0, %v1032
          %v1034 = vrcp.pop %v965
          %v1035 = vmul.f32 1.0, %v1034
          %v1036 = vrcp.pop %v966
          %v1037 = vmul.f32 1.0, %v1036
          %v1038 = vrcp.pop %v967
          %v1039 = vmul.f32 1.0, %v1038
          %v1040 = vrcp.pop %v968
          %v1041 = vmul.f32 1.0, %v1040
          %v1042 = vrcp.pop %v969
          %v1043 = vmul.f32 1.0, %v1042
          %v1044 = vrcp.pop %v970
          %v1045 = vmul.f32 1.0, %v1044
          %v1046 = vrcp.pop %v971
          %v1047 = vmul.f32 1.0, %v1046
          %v1048 = vrcp.pop %v972
          %v1049 = vmul.f32 1.0, %v1048
          %v1050 = vrcp.pop %v973
          %v1051 = vmul.f32 1.0, %v1050
          %v1052 = vrcp.pop %v974
          %v1053 = vmul.f32 1.0, %v1052
          %v1054 = vrcp.pop %v975
          %v1055 = vmul.f32 1.0, %v1054
          %v1056 = vrcp.pop %v976
          %v1057 = vmul.f32 1.0, %v1056
          %v1058 = vrcp.pop %v977
          %v1059 = vmul.f32 1.0, %v1058
          %v1060 = vrcp.pop %v978
          %v1061 = vmul.f32 1.0, %v1060
          %v1062 = vrcp.pop %v979
          %v1063 = vmul.f32 1.0, %v1062
          %v1064 = vrcp.pop %v980
          %v1065 = vmul.f32 1.0, %v1064
          %v1066 = vrcp.pop %v981
          %v1067 = vmul.f32 1.0, %v1066
          %v1068 = vrcp.pop %v982
          %v1069 = vmul.f32 1.0, %v1068
          %v1070 = vrcp.pop %v983
          %v1071 = vmul.f32 1.0, %v1070
          %v1072 = vrcp.pop %v984
          %v1073 = vmul.f32 1.0, %v1072
          %v1074 = vrcp.pop %v985
          %v1075 = vmul.f32 1.0, %v1074
          %v1076 = vrcp.pop %v986
          %v1077 = vmul.f32 1.0, %v1076
          %v1078 = vrcp.pop %v987
          %v1079 = vmul.f32 1.0, %v1078
          %v1080 = vrcp.pop %v988
          %v1081 = vmul.f32 1.0, %v1080
          %v1082 = vrcp.pop %v989
          %v1083 = vmul.f32 1.0, %v1082
          %v1084 = vrcp.pop %v990
          %v1085 = vmul.f32 1.0, %v1084
          %v1086 = vrcp.pop %v991
          %v1087 = vmul.f32 1.0, %v1086
          %v1088 = vpack.c.bf16 %v995, %v993
          %v1089 = vpack.c.bf16 %v999, %v997
          %v1090 = vpack.c.bf16 %v1003, %v1001
          %v1091 = vpack.c.bf16 %v1007, %v1005
          %v1092 = vpack.c.bf16 %v1011, %v1009
          %v1093 = vpack.c.bf16 %v1015, %v1013
          %v1094 = vpack.c.bf16 %v1019, %v1017
          %v1095 = vpack.c.bf16 %v1023, %v1021
          %v1096 = vpack.c.bf16 %v1027, %v1025
          %v1097 = vpack.c.bf16 %v1031, %v1029
          %v1098 = vpack.c.bf16 %v1035, %v1033
          %v1099 = vpack.c.bf16 %v1039, %v1037
          %v1100 = vpack.c.bf16 %v1043, %v1041
          %v1101 = vpack.c.bf16 %v1047, %v1045
          %v1102 = vpack.c.bf16 %v1051, %v1049
          %v1103 = vpack.c.bf16 %v1055, %v1053
          %v1104 = vpack.c.bf16 %v1059, %v1057
          %v1105 = vpack.c.bf16 %v1063, %v1061
          %v1106 = vpack.c.bf16 %v1067, %v1065
          %v1107 = vpack.c.bf16 %v1071, %v1069
          %v1108 = vpack.c.bf16 %v1075, %v1073
          %v1109 = vpack.c.bf16 %v1079, %v1077
          %v1110 = vpack.c.bf16 %v1083, %v1081
          %v1111 = vpack.c.bf16 %v1087, %v1085
          %1112 = vst [vmem:[#allocation2] sm:$0xff] %v1088
          %1113 = vst [vmem:[#allocation2 + $0x8] sm:$0xff] %v1089
          %1114 = vst [vmem:[#allocation2 + $0x10] sm:$0xff] %v1090
          %1115 = vst [vmem:[#allocation2 + $0x18] sm:$0xff] %v1091
          %1116 = vst [vmem:[#allocation2 + $0x20] sm:$0xff] %v1092
          %1117 = vst [vmem:[#allocation2 + $0x28] sm:$0xff] %v1093
          %1118 = vst [vmem:[#allocation2 + $0x30] sm:$0xff] %v1094
          %1119 = vst [vmem:[#allocation2 + $0x38] sm:$0xff] %v1095
          %1120 = vst [vmem:[#allocation2 + $0x40] sm:$0xff] %v1096
          %1121 = vst [vmem:[#allocation2 + $0x48] sm:$0xff] %v1097
          %1122 = vst [vmem:[#allocation2 + $0x50] sm:$0xff] %v1098
          %1123 = vst [vmem:[#allocation2 + $0x58] sm:$0xff] %v1099
          %1124 = vst [vmem:[#allocation2 + $0x60] sm:$0xff] %v1100
          %1125 = vst [vmem:[#allocation2 + $0x68] sm:$0xff] %v1101
          %1126 = vst [vmem:[#allocation2 + $0x70] sm:$0xff] %v1102
          %1127 = vst [vmem:[#allocation2 + $0x78] sm:$0xff] %v1103
          %1128 = vst [vmem:[#allocation2 + $0x80] sm:$0xff] %v1104
          %1129 = vst [vmem:[#allocation2 + $0x88] sm:$0xff] %v1105
          %1130 = vst [vmem:[#allocation2 + $0x90] sm:$0xff] %v1106
          %1131 = vst [vmem:[#allocation2 + $0x98] sm:$0xff] %v1107
          %1132 = vst [vmem:[#allocation2 + $0xa0] sm:$0xff] %v1108
          %1133 = vst [vmem:[#allocation2 + $0xa8] sm:$0xff] %v1109
          %1134 = vst [vmem:[#allocation2 + $0xb0] sm:$0xff] %v1110
          %1135 = vst [vmem:[#allocation2 + $0xb8] sm:$0xff] %v1111
        $region48: #{_qmlp_forward_impl.1} parent=39 // pred_fallthru
          _
        %v1136 = vld [vmem:[#allocation2] sm:$0xff]
        %v1137 = vld [vmem:[#allocation2 + $0x8] sm:$0xff]
        %v1138 = vld [vmem:[#allocation2 + $0x10] sm:$0xff]
        %v1139 = vld [vmem:[#allocation2 + $0x18] sm:$0xff]
        %v1140 = vld [vmem:[#allocation2 + $0x20] sm:$0xff]
        %v1141 = vld [vmem:[#allocation2 + $0x28] sm:$0xff]
        %v1142 = vld [vmem:[#allocation2 + $0x30] sm:$0xff]
        %v1143 = vld [vmem:[#allocation2 + $0x38] sm:$0xff]
        %v1144 = vld [vmem:[#allocation2 + $0x40] sm:$0xff]
        %v1145 = vld [vmem:[#allocation2 + $0x48] sm:$0xff]
        %v1146 = vld [vmem:[#allocation2 + $0x50] sm:$0xff]
        %v1147 = vld [vmem:[#allocation2 + $0x58] sm:$0xff]
        %v1148 = vld [vmem:[#allocation2 + $0x60] sm:$0xff]
        %v1149 = vld [vmem:[#allocation2 + $0x68] sm:$0xff]
        %v1150 = vld [vmem:[#allocation2 + $0x70] sm:$0xff]
        %v1151 = vld [vmem:[#allocation2 + $0x78] sm:$0xff]
        %v1152 = vld [vmem:[#allocation2 + $0x80] sm:$0xff]
        %v1153 = vld [vmem:[#allocation2 + $0x88] sm:$0xff]
        %v1154 = vld [vmem:[#allocation2 + $0x90] sm:$0xff]
        %v1155 = vld [vmem:[#allocation2 + $0x98] sm:$0xff]
        %v1156 = vld [vmem:[#allocation2 + $0xa0] sm:$0xff]
        %v1157 = vld [vmem:[#allocation2 + $0xa8] sm:$0xff]
        %v1158 = vld [vmem:[#allocation2 + $0xb0] sm:$0xff]
        %v1159 = vld [vmem:[#allocation2 + $0xb8] sm:$0xff]
        %v1160 = vld [vmem:[%s286] sm:$0xf]
        %v1161 = vld [vmem:[%s286 + $0x4] sm:$0xf]
        %v1162 = vld [vmem:[%s286 + $0x8] sm:$0xf]
        %v1163 = vld [vmem:[%s286 + $0xc] sm:$0xf]
        %v1164 = vld [vmem:[%s286 + $0x10] sm:$0xf]
        %v1165 = vld [vmem:[%s286 + $0x14] sm:$0xf]
        %v1166 = vld [vmem:[%s286 + $0x18] sm:$0xf]
        %v1167 = vld [vmem:[%s286 + $0x1c] sm:$0xf]
        %v1168 = vld [vmem:[%s286 + $0x20] sm:$0xf]
        %v1169 = vld [vmem:[%s286 + $0x24] sm:$0xf]
        %v1170 = vld [vmem:[%s286 + $0x28] sm:$0xf]
        %v1171 = vld [vmem:[%s286 + $0x2c] sm:$0xf]
        %v1172 = vld [vmem:[%s286 + $0x30] sm:$0xf]
        %v1173 = vld [vmem:[%s286 + $0x34] sm:$0xf]
        %v1174 = vld [vmem:[%s286 + $0x38] sm:$0xf]
        %v1175 = vld [vmem:[%s286 + $0x3c] sm:$0xf]
        %v1176 = vld [vmem:[%s289] sm:$0x1]
        %v1178 = vlaneseq
        %v1179 = vshrl.u32 %v1178, 7
        %v1180 = vsub.s32 0, %v1179
        %v1181 = vrot.slane %v1176, %v1180
        %v1199 = vunpack.c.l.b16 %v1160
        %v1200 = vunpack.c.l.b16 %v1161
        %v1201 = vunpack.c.l.b16 %v1162
        %v1202 = vunpack.c.l.b16 %v1163
        %v1203 = vunpack.c.l.b16 %v1164
        %v1204 = vunpack.c.l.b16 %v1165
        %v1205 = vunpack.c.l.b16 %v1166
        %v1206 = vunpack.c.l.b16 %v1167
        %v1207 = vunpack.c.l.b16 %v1168
        %v1208 = vunpack.c.l.b16 %v1169
        %v1209 = vunpack.c.l.b16 %v1170
        %v1210 = vunpack.c.l.b16 %v1171
        %v1211 = vunpack.c.l.b16 %v1172
        %v1212 = vunpack.c.l.b16 %v1173
        %v1213 = vunpack.c.l.b16 %v1174
        %v1214 = vunpack.c.l.b16 %v1175
        %v1215 = vpack.c.b16 %v1200, %v1199
        %v1216 = vpack.c.b16 %v1202, %v1201
        %v1217 = vpack.c.b16 %v1204, %v1203
        %v1218 = vpack.c.b16 %v1206, %v1205
        %v1219 = vpack.c.b16 %v1208, %v1207
        %v1220 = vpack.c.b16 %v1210, %v1209
        %v1221 = vpack.c.b16 %v1212, %v1211
        %v1222 = vpack.c.b16 %v1214, %v1213
        %1231 = vmatprep.subr.bf16.mxu0 0
        %1232 = vmatpush1.bf16.msra.mxu0 %v1215
        %1233 = vmatprep.subr.bf16.mxu0 0
        %1234 = vmatpush1.bf16.msra.mxu0 %v1216
        %1235 = vmatprep.subr.bf16.mxu0 0
        %1236 = vmatpush1.bf16.msra.mxu0 %v1217
        %1237 = vmatprep.subr.bf16.mxu0 0
        %1238 = vmatpush1.bf16.msra.mxu0 %v1218
        %1239 = vmatprep.subr.bf16.mxu0 0
        %1240 = vmatpush1.bf16.msra.mxu0 %v1219
        %1241 = vmatprep.subr.bf16.mxu0 0
        %1242 = vmatpush1.bf16.msra.mxu0 %v1220
        %1243 = vmatprep.subr.bf16.mxu0 0
        %1244 = vmatpush1.bf16.msra.mxu0 %v1221
        %1245 = vmatprep.subr.bf16.mxu0 0
        %1246 = vmatpush1.bf16.msra.mxu0 %v1222
        %1247 = vmatprep.subr.bf16.mxu0 0
        %1248 = vmatpush1.bf16.msra.mxu0 0
        %1249 = vmatprep.subr.bf16.mxu0 0
        %1250 = vmatpush1.bf16.msra.mxu0 0
        %1251 = vmatprep.subr.bf16.mxu0 0
        %1252 = vmatpush1.bf16.msra.mxu0 0
        %1253 = vmatprep.subr.bf16.mxu0 0
        %1254 = vmatpush1.bf16.msra.mxu0 0
        %1255 = vmatprep.subr.bf16.mxu0 0
        %1256 = vmatpush1.bf16.msra.mxu0 0
        %1257 = vmatprep.subr.bf16.mxu0 0
        %1258 = vmatpush1.bf16.msra.mxu0 0
        %1259 = vmatprep.subr.bf16.mxu0 0
        %1260 = vmatpush1.bf16.msra.mxu0 0
        %1261 = vmatprep.subr.bf16.mxu0 0
        %1262 = vmatpush1.bf16.msra.mxu0 0
        %1263 = vmatprep.mubr.bf16.mxu0 0
        %1264 = vmatmul.mubr.bf16.gmra.mrb[0].mxu0 %v1136
        %v1265 = vpop.f32.mrb[0].mxu0
        %v1266 = vadd.f32 %v1181, %v1265
        %v1267 = vpop.f32.mrb[0].mxu0
        %v1268 = vpop.f32.mrb[0].mxu0
        %v1269 = vadd.f32 %v1181, %v1268
        %v1270 = vpop.f32.mrb[0].mxu0
        %1271 = vmatprep.mubr.bf16.mxu0 0
        %1272 = vmatmul.mubr.bf16.gmra.mrb[0].mxu0 %v1137
        %v1273 = vpop.f32.mrb[0].mxu0
        %v1274 = vadd.f32 %v1181, %v1273
        %v1275 = vpop.f32.mrb[0].mxu0
        %v1276 = vpop.f32.mrb[0].mxu0
        %v1277 = vadd.f32 %v1181, %v1276
        %v1278 = vpop.f32.mrb[0].mxu0
        %1279 = vmatprep.mubr.bf16.mxu0 0
        %1280 = vmatmul.mubr.bf16.gmra.mrb[0].mxu0 %v1138
        %v1281 = vpop.f32.mrb[0].mxu0
        %v1282 = vadd.f32 %v1181, %v1281
        %v1283 = vpop.f32.mrb[0].mxu0
        %v1284 = vpop.f32.mrb[0].mxu0
        %v1285 = vadd.f32 %v1181, %v1284
        %v1286 = vpop.f32.mrb[0].mxu0
        %1287 = vmatprep.mubr.bf16.mxu0 0
        %1288 = vmatmul.mubr.bf16.gmra.mrb[0].mxu0 %v1139
        %v1289 = vpop.f32.mrb[0].mxu0
        %v1290 = vadd.f32 %v1181, %v1289
        %v1291 = vpop.f32.mrb[0].mxu0
        %v1292 = vpop.f32.mrb[0].mxu0
        %v1293 = vadd.f32 %v1181, %v1292
        %v1294 = vpop.f32.mrb[0].mxu0
        %1295 = vmatprep.mubr.bf16.mxu0 0
        %1296 = vmatmul.mubr.bf16.gmra.mrb[0].mxu0 %v1140
        %v1297 = vpop.f32.mrb[0].mxu0
        %v1298 = vadd.f32 %v1181, %v1297
        %v1299 = vpop.f32.mrb[0].mxu0
        %v1300 = vpop.f32.mrb[0].mxu0
        %v1301 = vadd.f32 %v1181, %v1300
        %v1302 = vpop.f32.mrb[0].mxu0
        %1303 = vmatprep.mubr.bf16.mxu0 0
        %1304 = vmatmul.mubr.bf16.gmra.mrb[0].mxu0 %v1141
        %v1305 = vpop.f32.mrb[0].mxu0
        %v1306 = vadd.f32 %v1181, %v1305
        %v1307 = vpop.f32.mrb[0].mxu0
        %v1308 = vpop.f32.mrb[0].mxu0
        %v1309 = vadd.f32 %v1181, %v1308
        %v1310 = vpop.f32.mrb[0].mxu0
        %1311 = vmatprep.mubr.bf16.mxu0 0
        %1312 = vmatmul.mubr.bf16.gmra.mrb[0].mxu0 %v1142
        %v1313 = vpop.f32.mrb[0].mxu0
        %v1314 = vadd.f32 %v1181, %v1313
        %v1315 = vpop.f32.mrb[0].mxu0
        %v1316 = vpop.f32.mrb[0].mxu0
        %v1317 = vadd.f32 %v1181, %v1316
        %v1318 = vpop.f32.mrb[0].mxu0
        %1319 = vmatprep.mubr.bf16.mxu0 0
        %1320 = vmatmul.mubr.bf16.gmra.mrb[0].mxu0 %v1143
        %v1321 = vpop.f32.mrb[0].mxu0
        %v1322 = vadd.f32 %v1181, %v1321
        %v1323 = vpop.f32.mrb[0].mxu0
        %v1324 = vpop.f32.mrb[0].mxu0
        %v1325 = vadd.f32 %v1181, %v1324
        %v1326 = vpop.f32.mrb[0].mxu0
        %1327 = vmatprep.mubr.bf16.mxu0 0
        %1328 = vmatmul.mubr.bf16.gmra.mrb[0].mxu0 %v1144
        %v1329 = vpop.f32.mrb[0].mxu0
        %v1330 = vadd.f32 %v1181, %v1329
        %v1331 = vpop.f32.mrb[0].mxu0
        %v1332 = vpop.f32.mrb[0].mxu0
        %v1333 = vadd.f32 %v1181, %v1332
        %v1334 = vpop.f32.mrb[0].mxu0
        %1335 = vmatprep.mubr.bf16.mxu0 0
        %1336 = vmatmul.mubr.bf16.gmra.mrb[0].mxu0 %v1145
        %v1337 = vpop.f32.mrb[0].mxu0
        %v1338 = vadd.f32 %v1181, %v1337
        %v1339 = vpop.f32.mrb[0].mxu0
        %v1340 = vpop.f32.mrb[0].mxu0
        %v1341 = vadd.f32 %v1181, %v1340
        %v1342 = vpop.f32.mrb[0].mxu0
        %1343 = vmatprep.mubr.bf16.mxu0 0
        %1344 = vmatmul.mubr.bf16.gmra.mrb[0].mxu0 %v1146
        %v1345 = vpop.f32.mrb[0].mxu0
        %v1346 = vadd.f32 %v1181, %v1345
        %v1347 = vpop.f32.mrb[0].mxu0
        %v1348 = vpop.f32.mrb[0].mxu0
        %v1349 = vadd.f32 %v1181, %v1348
        %v1350 = vpop.f32.mrb[0].mxu0
        %1351 = vmatprep.mubr.bf16.mxu0 0
        %1352 = vmatmul.mubr.bf16.gmra.mrb[0].mxu0 %v1147
        %v1353 = vpop.f32.mrb[0].mxu0
        %v1354 = vadd.f32 %v1181, %v1353
        %v1355 = vpop.f32.mrb[0].mxu0
        %v1356 = vpop.f32.mrb[0].mxu0
        %v1357 = vadd.f32 %v1181, %v1356
        %v1358 = vpop.f32.mrb[0].mxu0
        %1359 = vmatprep.mubr.bf16.mxu0 0
        %1360 = vmatmul.mubr.bf16.gmra.mrb[0].mxu0 %v1148
        %v1361 = vpop.f32.mrb[0].mxu0
        %v1362 = vadd.f32 %v1181, %v1361
        %v1363 = vpop.f32.mrb[0].mxu0
        %v1364 = vpop.f32.mrb[0].mxu0
        %v1365 = vadd.f32 %v1181, %v1364
        %v1366 = vpop.f32.mrb[0].mxu0
        %1367 = vmatprep.mubr.bf16.mxu0 0
        %1368 = vmatmul.mubr.bf16.gmra.mrb[0].mxu0 %v1149
        %v1369 = vpop.f32.mrb[0].mxu0
        %v1370 = vadd.f32 %v1181, %v1369
        %v1371 = vpop.f32.mrb[0].mxu0
        %v1372 = vpop.f32.mrb[0].mxu0
        %v1373 = vadd.f32 %v1181, %v1372
        %v1374 = vpop.f32.mrb[0].mxu0
        %1375 = vmatprep.mubr.bf16.mxu0 0
        %1376 = vmatmul.mubr.bf16.gmra.mrb[0].mxu0 %v1150
        %v1377 = vpop.f32.mrb[0].mxu0
        %v1378 = vadd.f32 %v1181, %v1377
        %v1379 = vpop.f32.mrb[0].mxu0
        %v1380 = vpop.f32.mrb[0].mxu0
        %v1381 = vadd.f32 %v1181, %v1380
        %v1382 = vpop.f32.mrb[0].mxu0
        %1383 = vmatprep.mubr.bf16.mxu0 0
        %1384 = vmatmul.mubr.bf16.gmra.mrb[0].mxu0 %v1151
        %v1385 = vpop.f32.mrb[0].mxu0
        %v1386 = vadd.f32 %v1181, %v1385
        %v1387 = vpop.f32.mrb[0].mxu0
        %v1388 = vpop.f32.mrb[0].mxu0
        %v1389 = vadd.f32 %v1181, %v1388
        %v1390 = vpop.f32.mrb[0].mxu0
        %1391 = vmatprep.mubr.bf16.mxu0 0
        %1392 = vmatmul.mubr.bf16.gmra.mrb[0].mxu0 %v1152
        %v1393 = vpop.f32.mrb[0].mxu0
        %v1394 = vadd.f32 %v1181, %v1393
        %v1395 = vpop.f32.mrb[0].mxu0
        %v1396 = vpop.f32.mrb[0].mxu0
        %v1397 = vadd.f32 %v1181, %v1396
        %v1398 = vpop.f32.mrb[0].mxu0
        %1399 = vmatprep.mubr.bf16.mxu0 0
        %1400 = vmatmul.mubr.bf16.gmra.mrb[0].mxu0 %v1153
        %v1401 = vpop.f32.mrb[0].mxu0
        %v1402 = vadd.f32 %v1181, %v1401
        %v1403 = vpop.f32.mrb[0].mxu0
        %v1404 = vpop.f32.mrb[0].mxu0
        %v1405 = vadd.f32 %v1181, %v1404
        %v1406 = vpop.f32.mrb[0].mxu0
        %1407 = vmatprep.mubr.bf16.mxu0 0
        %1408 = vmatmul.mubr.bf16.gmra.mrb[0].mxu0 %v1154
        %v1409 = vpop.f32.mrb[0].mxu0
        %v1410 = vadd.f32 %v1181, %v1409
        %v1411 = vpop.f32.mrb[0].mxu0
        %v1412 = vpop.f32.mrb[0].mxu0
        %v1413 = vadd.f32 %v1181, %v1412
        %v1414 = vpop.f32.mrb[0].mxu0
        %1415 = vmatprep.mubr.bf16.mxu0 0
        %1416 = vmatmul.mubr.bf16.gmra.mrb[0].mxu0 %v1155
        %v1417 = vpop.f32.mrb[0].mxu0
        %v1418 = vadd.f32 %v1181, %v1417
        %v1419 = vpop.f32.mrb[0].mxu0
        %v1420 = vpop.f32.mrb[0].mxu0
        %v1421 = vadd.f32 %v1181, %v1420
        %v1422 = vpop.f32.mrb[0].mxu0
        %1423 = vmatprep.mubr.bf16.mxu0 0
        %1424 = vmatmul.mubr.bf16.gmra.mrb[0].mxu0 %v1156
        %v1425 = vpop.f32.mrb[0].mxu0
        %v1426 = vadd.f32 %v1181, %v1425
        %v1427 = vpop.f32.mrb[0].mxu0
        %v1428 = vpop.f32.mrb[0].mxu0
        %v1429 = vadd.f32 %v1181, %v1428
        %v1430 = vpop.f32.mrb[0].mxu0
        %1431 = vmatprep.mubr.bf16.mxu0 0
        %1432 = vmatmul.mubr.bf16.gmra.mrb[0].mxu0 %v1157
        %v1433 = vpop.f32.mrb[0].mxu0
        %v1434 = vadd.f32 %v1181, %v1433
        %v1435 = vpop.f32.mrb[0].mxu0
        %v1436 = vpop.f32.mrb[0].mxu0
        %v1437 = vadd.f32 %v1181, %v1436
        %v1438 = vpop.f32.mrb[0].mxu0
        %1439 = vmatprep.mubr.bf16.mxu0 0
        %1440 = vmatmul.mubr.bf16.gmra.mrb[0].mxu0 %v1158
        %v1441 = vpop.f32.mrb[0].mxu0
        %v1442 = vadd.f32 %v1181, %v1441
        %v1443 = vpop.f32.mrb[0].mxu0
        %v1444 = vpop.f32.mrb[0].mxu0
        %v1445 = vadd.f32 %v1181, %v1444
        %v1446 = vpop.f32.mrb[0].mxu0
        %1447 = vmatprep.mubr.bf16.mxu0 0
        %1448 = vmatmul.mubr.bf16.gmra.mrb[0].mxu0 %v1159
        %v1449 = vpop.f32.mrb[0].mxu0
        %v1450 = vadd.f32 %v1181, %v1449
        %v1451 = vpop.f32.mrb[0].mxu0
        %v1452 = vpop.f32.mrb[0].mxu0
        %v1453 = vadd.f32 %v1181, %v1452
        %v1454 = vpop.f32.mrb[0].mxu0
        %1455 = vdwg.mxu0
        %1456 = vst [vmem:[%s281] sm:$0xff] %v1266
        %1457 = vst [vmem:[%s281 + $0x8] sm:$0xff] %v1269
        %1458 = vst [vmem:[%s281 + $0x10] sm:$0xff] %v1274
        %1459 = vst [vmem:[%s281 + $0x18] sm:$0xff] %v1277
        %1460 = vst [vmem:[%s281 + $0x20] sm:$0xff] %v1282
        %1461 = vst [vmem:[%s281 + $0x28] sm:$0xff] %v1285
        %1462 = vst [vmem:[%s281 + $0x30] sm:$0xff] %v1290
        %1463 = vst [vmem:[%s281 + $0x38] sm:$0xff] %v1293
        %1464 = vst [vmem:[%s281 + $0x40] sm:$0xff] %v1298
        %1465 = vst [vmem:[%s281 + $0x48] sm:$0xff] %v1301
        %1466 = vst [vmem:[%s281 + $0x50] sm:$0xff] %v1306
        %1467 = vst [vmem:[%s281 + $0x58] sm:$0xff] %v1309
        %1468 = vst [vmem:[%s281 + $0x60] sm:$0xff] %v1314
        %1469 = vst [vmem:[%s281 + $0x68] sm:$0xff] %v1317
        %1470 = vst [vmem:[%s281 + $0x70] sm:$0xff] %v1322
        %1471 = vst [vmem:[%s281 + $0x78] sm:$0xff] %v1325
        %1472 = vst [vmem:[%s281 + $0x80] sm:$0xff] %v1330
        %1473 = vst [vmem:[%s281 + $0x88] sm:$0xff] %v1333
        %1474 = vst [vmem:[%s281 + $0x90] sm:$0xff] %v1338
        %1475 = vst [vmem:[%s281 + $0x98] sm:$0xff] %v1341
        %1476 = vst [vmem:[%s281 + $0xa0] sm:$0xff] %v1346
        %1477 = vst [vmem:[%s281 + $0xa8] sm:$0xff] %v1349
        %1478 = vst [vmem:[%s281 + $0xb0] sm:$0xff] %v1354
        %1479 = vst [vmem:[%s281 + $0xb8] sm:$0xff] %v1357
        %1480 = vst [vmem:[%s281 + $0xc0] sm:$0xff] %v1362
        %1481 = vst [vmem:[%s281 + $0xc8] sm:$0xff] %v1365
        %1482 = vst [vmem:[%s281 + $0xd0] sm:$0xff] %v1370
        %1483 = vst [vmem:[%s281 + $0xd8] sm:$0xff] %v1373
        %1484 = vst [vmem:[%s281 + $0xe0] sm:$0xff] %v1378
        %1485 = vst [vmem:[%s281 + $0xe8] sm:$0xff] %v1381
        %1486 = vst [vmem:[%s281 + $0xf0] sm:$0xff] %v1386
        %1487 = vst [vmem:[%s281 + $0xf8] sm:$0xff] %v1389
        %1488 = vst [vmem:[%s281 + $0x100] sm:$0xff] %v1394
        %1489 = vst [vmem:[%s281 + $0x108] sm:$0xff] %v1397
        %1490 = vst [vmem:[%s281 + $0x110] sm:$0xff] %v1402
        %1491 = vst [vmem:[%s281 + $0x118] sm:$0xff] %v1405
        %1492 = vst [vmem:[%s281 + $0x120] sm:$0xff] %v1410
        %1493 = vst [vmem:[%s281 + $0x128] sm:$0xff] %v1413
        %1494 = vst [vmem:[%s281 + $0x130] sm:$0xff] %v1418
        %1495 = vst [vmem:[%s281 + $0x138] sm:$0xff] %v1421
        %1496 = vst [vmem:[%s281 + $0x140] sm:$0xff] %v1426
        %1497 = vst [vmem:[%s281 + $0x148] sm:$0xff] %v1429
        %1498 = vst [vmem:[%s281 + $0x150] sm:$0xff] %v1434
        %1499 = vst [vmem:[%s281 + $0x158] sm:$0xff] %v1437
        %1500 = vst [vmem:[%s281 + $0x160] sm:$0xff] %v1442
        %1501 = vst [vmem:[%s281 + $0x168] sm:$0xff] %v1445
        %1502 = vst [vmem:[%s281 + $0x170] sm:$0xff] %v1450
        %1503 = vst [vmem:[%s281 + $0x178] sm:$0xff] %v1453
        %s1504 = sand.u32 %s164, 1
        %s1505 = scalar_lea.sflag [#allocation5], %s1504
        %s1506 = sand.u32 %s164, 1
        %s1507 = smul.addr %s1506, 384
        %s1508 = scalar_lea.vmem [#allocation6], %s1507
        // Predicated region
        $region49: #{_qmlp_forward_impl.1} parent=39 // pred_check
          %p1509 = pneg %p174
        $region50: #{_qmlp_forward_impl.1} parent=39 // pred_check_branch
          %1511 = sbr.rel (%p1509) target = $region52
        $region51: #{_qmlp_forward_impl.1} parent=39 // pred_region
          %s1512 = smul.u32 48, %s26
          %s1514 = ssub.s32 6144, 6144
          %1515 = vsyncadd %s1505, %s1514
          %s1516 = sadd.s32 %s27, %s1512
          %s1517 = smul.addr %s1516, 128
          %s1518 = scalar_lea.hbm %s5, %s1517
          %s1519 = sshll.u32 %s1508, 4
          %s1520 = int_to_ptr.vmem [resolvable:$true] %s1519
          %1525 = dma.vmem_to_hbm [thread:$0]  %s1520, 6144, %s1518, %s1505, 128, 128, 8
        $region52: #{_qmlp_forward_impl.1} parent=39 // pred_fallthru
          _
      $region40: #{_qmlp_forward_impl.1} parent=5 // pred_fallthru
        _
      %p1526 = scmp.le.s32.totalorder 2, %s17
      // Predicated region
      $region53: #{_qmlp_forward_impl.1} parent=5 // pred_check
        %p1527 = pneg %p1526
      $region54: #{_qmlp_forward_impl.1} parent=5 // pred_check_branch
        %1529 = sbr.rel (%p1527) target = $region56
      $region55: #{_qmlp_forward_impl.1} parent=5 // pred_region
        %s1530 = ssub.s32 %s17, 2
        // Predicated region
        $region57: #{_qmlp_forward_impl.1} parent=55 // pred_check
          %p1531 = pneg %p180
        $region58: #{_qmlp_forward_impl.1} parent=55 // pred_check_branch
          %1533 = sbr.rel (%p1531) target = $region60
        $region59: #{_qmlp_forward_impl.1} parent=55 // pred_region
          %s1534 = sand.u32 %s165, 1
          %s1535 = scalar_lea.sflag [#allocation5], %s1534
          %s1536 = sand.u32 %s165, 1
          %s1537 = smul.addr %s1536, 384
          %s1538 = scalar_lea.vmem [#allocation6], %s1537
          %1539 = dma.done %s1535, 6144
        $region60: #{_qmlp_forward_impl.1} parent=55 // pred_fallthru
          _
      $region56: #{_qmlp_forward_impl.1} parent=5 // pred_fallthru
        _
    $region6: #{_qmlp_forward_impl.1} parent=1 // loop_footer
      %s21 = sadd.s32 1, %s17
    $region7: #{_qmlp_forward_impl.1} parent=1 // loop_footer_branch
      %16 = sbr.rel target = $region3
    $region8: #{_qmlp_forward_impl.1} parent=1 // loop_exit
      _
    %1540 = vsyncpa [#allocation4], 1
    %s1541 = scalar_lea.sflag [#allocation4], 1
    %1542 = vsyncpa %s1541, 1
    %1543 = vsyncpa [#allocation5], 1
    %s1544 = scalar_lea.sflag [#allocation5], 1
    %1545 = vsyncpa %s1544, 1

</llo_original>
